<compile_context>
chip_gen: v6e
topology: v6e:2x2x1
jax: 0.10.0
libtpu: 0.0.40
codegen_flags: <defaults>
</compile_context>

<pallas_src>
import functools
import math

import jax
import jax.numpy as jnp
from jax.experimental import pallas as pl
from jax.experimental.pallas import tpu as pltpu


def _round_up(x, m):
    return (x + m - 1) // m * m


def _num_tensorcores():
    """TensorCores per chip: v4/v5p/v7x (megacore) -> 2, v5e/v6e -> 1."""
    try:
        info = pltpu.get_tpu_info()
        for attr in ("num_cores", "core_count", "num_tensorcores",
                     "tensorcores_per_chip", "cores_per_chip"):
            v = getattr(info, attr, None)
            if isinstance(v, int) and v > 0:
                return v
    except Exception:
        pass
    try:
        kind = jax.devices()[0].device_kind.lower()
        if any(tag in kind for tag in ("v7", "7x", "v4", "v5p")):
            return 2
    except Exception:
        pass
    return 1


def _vmem_capacity_bytes():
    """Physical per-core VMEM bytes; conservative fallback = 64 MiB (v7x)."""
    try:
        v = getattr(pltpu.get_tpu_info(), "vmem_capacity_bytes", None)
        if isinstance(v, int) and v > 0:
            return v
    except Exception:
        pass
    try:
        kind = jax.devices()[0].device_kind.lower()
        if "v7" in kind or "7x" in kind:
            return 64 << 20
        return 128 << 20
    except Exception:
        return 64 << 20


def _single_attention_kernel(seq_ref, enc_ref, w_seq_ref, w_enc_ref, bias_ref,
                             o_ref, *, dk, dk_pad, matmul_dtype):
    # seq_ref  : (Bb, S, F)
    # enc_ref  : (Bb, S, Ep+Et)          pos_enc ++ time_enc (wrapper concat)
    # w_seq_ref: (F,      dk_pad + dk)   fused [Wq^T/sqrt(dk) | pad | Wk^T] rows
    # w_enc_ref: (Ep+Et,  dk_pad + dk)
    # bias_ref : (S, S) additive mask bias (0 keep / -1e30 drop)
    # o_ref    : (Bb, S, F)
    Bb, S, F = seq_ref.shape
    Eenc = enc_ref.shape[-1]

    seq = seq_ref[...]                            # loaded once, reused for PV
    seq_mm = seq.astype(matmul_dtype)
    enc_mm = enc_ref[...].astype(matmul_dtype)

    # --- fused (scaled-)Q | K projection: 2 dots, no input concat ----------
    # Leading-dim reshapes only (no lane relayout).
    seq2 = seq_mm.reshape(Bb * S, F)
    enc2 = enc_mm.reshape(Bb * S, Eenc)
    qk = jnp.dot(seq2, w_seq_ref[...], preferred_element_type=jnp.float32)
    qk = qk + jnp.dot(enc2, w_enc_ref[...], preferred_element_type=jnp.float32)
    qk = qk.reshape(Bb, S, dk_pad + dk)

    q = qk[:, :, :dk]                             # already scaled by 1/sqrt(dk)
    k = qk[:, :, dk_pad:dk_pad + dk]              # lane-aligned when 2*dk > 128

    # --- scores: contract last dims directly (no K transpose) --------------
    scores = jnp.einsum('bqd,bkd->bqk',
                        q.astype(matmul_dtype), k.astype(matmul_dtype),
                        preferred_element_type=jnp.float32)    # [Bb, S, S]

    # masked_softmax: clamp(max=10) then additive mask bias then softmax
    scores = jnp.minimum(scores, 10.0) + bias_ref[...][None]

    m = jnp.max(scores, axis=-1, keepdims=True)
    p = jnp.exp(scores - m)
    p = p * pl.reciprocal(jnp.sum(p, axis=-1, keepdims=True), approx=True)

    # --- PV: reuse the seq block already resident in VMEM ------------------
    out = jnp.einsum('bqk,bkf->bqf', p.astype(matmul_dtype), seq_mm,
                     preferred_element_type=jnp.float32)       # [Bb, S, F]
    # TODO(synk): lane-dense writeback (present output as (Bb, S*F)) for
    #             production shapes where F < 128.
    o_ref[...] = out.astype(o_ref.dtype)


def _choose_block_b(B, n_cores, max_bb):
    """Pick block_b (a divisor of B, <= max_bb) given the core count."""
    divisors = [d for d in range(1, B + 1) if B % d == 0]
    fitting = [d for d in divisors if d <= max_bb] or [1]
    if n_cores <= 1 or B < 2:
        # Single TensorCore: one grid step => minimal per-step overhead and
        # maximal MXU row occupancy (block_b * S rows per projection matmul).
        return max(fitting)
    # 2 TensorCores (megacore): prefer >=2 grid steps, even step count, then
    # the biggest block_b that still fits VMEM.
    best_key, best_d = None, 1
    for d in fitting:
        g = B // d
        key = (g >= 2, g % 2 == 0, d)
        if best_key is None or key > best_key:
            best_key, best_d = key, d
    return best_d


def single_attention(seq, pos_enc, time_enc, wq, wk, *,
                     causality=True, block_b=None, matmul_dtype=None):
    """Pallas forward pass of SingleAttention (activation=Identity).

    seq: [B, S, F] f32; pos_enc/time_enc: [B, S, E] f32
    wq, wk: [d_model, input_dim] f32 (PyTorch Linear weight layout, no bias)
    Returns [B, S, F] f32.
    """
    assert pos_enc is not None and time_enc is not None, \
        "kernel path expects pos_enc and time_enc"  # TODO(synk): None variants

    B, S, F = seq.shape
    Ep = pos_enc.shape[-1]
    Et = time_enc.shape[-1]
    Eenc = Ep + Et
    dk, Din = wq.shape
    assert wk.shape == (dk, Din) and Din == F + Eenc

    # bf16 MXU operands only when the contractions are big enough to be
    # MXU-bound; at toy sizes f32 keeps tight parity with the f32 reference.
    if matmul_dtype is None:
        matmul_dtype = (jnp.bfloat16
                        if (S >= 128 or dk >= 128 or Din >= 256)
                        else jnp.float32)

    # --- wrapper-side weight fusion -----------------------------------------
    # Fold 1/sqrt(dk) into Wq; fuse Q|K into one [Din, dk_pad + dk] weight.
    # When 2*dk > 128, pad the Q half to a 128-lane boundary so the in-kernel
    # K slice starts on a lane-tile boundary (free sub-view, no XLU rotate).
    inv_sqrt_dk = 1.0 / math.sqrt(float(dk))
    dk_pad = _round_up(dk, 128) if (2 * dk > 128) else dk
    wq_t = (wq * inv_sqrt_dk).T                                # [Din, dk]
    if dk_pad > dk:
        wq_t = jnp.pad(wq_t, ((0, 0), (0, dk_pad - dk)))
    w_fused = jnp.concatenate([wq_t, wk.T], axis=1)            # [Din, dk_pad+dk]
    Wd = dk_pad + dk
    w_seq_t = w_fused[:F].astype(matmul_dtype)                 # [F,    Wd]
    w_enc_t = w_fused[F:].astype(matmul_dtype)                 # [Eenc, Wd]

    # Merge pos/time into one input stream (one DMA + one dot instead of two).
    enc = jnp.concatenate([pos_enc, time_enc], axis=-1)        # [B, S, Eenc]

    # Precomputed additive mask bias (torch.triu semantics: keep col >= row).
    if causality:
        row = jnp.arange(S)[:, None]
        col = jnp.arange(S)[None, :]
        bias = jnp.where(col >= row, 0.0, -1e30).astype(jnp.float32)
    else:
        bias = jnp.zeros((S, S), jnp.float32)

    # --- generation-aware block_b / grid selection --------------------------
    n_cores = _num_tensorcores()
    vmem_cap = _vmem_capacity_bytes()
    lane, f32b = 128, 4
    S_pad = _round_up(S, 8)
    wbytes = 2 if matmul_dtype == jnp.bfloat16 else 4
    # Padded-tile VMEM bytes per batch element in one grid step.
    per_b = (
        2 * S_pad * _round_up(F, lane) * f32b        # seq block (double-buffered)
        + 2 * S_pad * _round_up(Eenc, lane) * f32b   # enc block (double-buffered)
        + 2 * S_pad * _round_up(F, lane) * f32b      # out block (double-buffered)
        + S_pad * _round_up(Wd, lane) * f32b         # fused qk projection
        + 2 * S_pad * _round_up(S, lane) * f32b      # scores + softmax probs
        + S_pad * _round_up(F, lane) * f32b          # f32 PV accumulator
    )
    fixed = (2 * (_round_up(F, 8) + _round_up(Eenc, 8)) * _round_up(Wd, lane)
             * wbytes
             + 2 * S_pad * _round_up(S, lane) * f32b)           # weights + bias
    budget = int(0.6 * vmem_cap) - fixed
    max_bb = max(1, budget // max(per_b, 1))

    if block_b is None:
        block_b = _choose_block_b(B, n_cores, max_bb)
    assert B % block_b == 0
    grid_b = B // block_b

    est = fixed + block_b * per_b + (2 << 20)
    vmem_limit = int(min(int(0.75 * vmem_cap), max(32 << 20, 2 * est)))

    kernel = functools.partial(_single_attention_kernel,
                               dk=dk, dk_pad=dk_pad, matmul_dtype=matmul_dtype)
    args = (seq, enc, w_seq_t, w_enc_t, bias)

    def _build(single_buffer_weights):
        # Weights / bias have a constant block index across the grid; a single
        # buffer halves their VMEM footprint (matters most under v7x's 64 MiB).
        wkw = (dict(pipeline_mode=pl.Buffered(1))
               if single_buffer_weights else {})
        return pl.pallas_call(
            kernel,
            out_shape=jax.ShapeDtypeStruct((B, S, F), seq.dtype),
            grid_spec=pltpu.PrefetchScalarGridSpec(
                num_scalar_prefetch=0,
                grid=(grid_b,),
                in_specs=[
                    pl.BlockSpec((block_b, S, F), lambda b: (b, 0, 0)),
                    pl.BlockSpec((block_b, S, Eenc), lambda b: (b, 0, 0)),
                    pl.BlockSpec((F, Wd), lambda b: (0, 0), **wkw),
                    pl.BlockSpec((Eenc, Wd), lambda b: (0, 0), **wkw),
                    pl.BlockSpec((S, S), lambda b: (0, 0), **wkw),
                ],
                out_specs=pl.BlockSpec((block_b, S, F), lambda b: (b, 0, 0)),
            ),
            compiler_params=pltpu.CompilerParams(
                dimension_semantics=("parallel",),
                vmem_limit_bytes=vmem_limit),
        )

    try:
        return _build(True)(*args)
    except Exception:
        # Fallback: this jax build rejects pipeline_mode=pl.Buffered(1);
        # default double-buffered weights are only a small VMEM overhead.
        return _build(False)(*args)


def _reference(seq, pos_enc, time_enc, wq, wk, causality=True):
    """Plain-JAX reference mirroring the PyTorch forward exactly."""
    qk = jnp.concatenate([seq, pos_enc, time_enc], axis=-1)
    q = jnp.einsum("bsd,kd->bsk", qk, wq)
    k = jnp.einsum("bsd,kd->bsk", qk, wk)
    dk = wq.shape[0]
    att = jnp.einsum("bqk,bpk->bqp", q, k) / jnp.sqrt(jnp.float32(dk))
    att = jnp.minimum(att, 10.0)
    S = seq.shape[1]
    if causality:
        mask = jnp.triu(jnp.ones((S, S), dtype=bool))
        att = jnp.where(mask[None], att, -jnp.inf)
    att = jax.nn.softmax(att, axis=-1)
    return jnp.einsum("bqp,bpf->bqf", att, seq)


if __name__ == "__main__":
    # Small shapes consistent with the module's forward:
    B, S, F, E = 2, 8, 16, 8
    input_dim = F + E + E          # seq ++ pos_enc ++ time_enc
    d_model = 32

    key = jax.random.PRNGKey(0)
    k1, k2, k3, k4, k5 = jax.random.split(key, 5)
    seq = jax.random.normal(k1, (B, S, F), dtype=jnp.float32)
    pos_enc = jax.random.normal(k2, (B, S, E), dtype=jnp.float32)
    time_enc = jax.random.normal(k3, (B, S, E), dtype=jnp.float32)
    # Deterministic Linear weights (no bias), PyTorch layout [out, in].
    bound = 1.0 / math.sqrt(input_dim)
    wq = jax.random.uniform(k4, (d_model, input_dim), jnp.float32, -bound, bound)
    wk = jax.random.uniform(k5, (d_model, input_dim), jnp.float32, -bound, bound)

    ref_c = _reference(seq, pos_enc, time_enc, wq, wk, causality=True)
    ref_nc = _reference(seq, pos_enc, time_enc, wq, wk, causality=False)

    # 1) default path (f32 matmuls at these toy sizes), causal
    #    NOTE: causality keeps col >= row (self + future), matching torch.triu
    #    in the original module (anti-conventional but faithful to the spec).
    out = jax.block_until_ready(
        single_attention(seq, pos_enc, time_enc, wq, wk, causality=True))
    assert out.shape == (B, S, F)
    # Tolerance relaxed slightly for pl.reciprocal(approx=True) in the softmax.
    assert jnp.allclose(out, ref_c, atol=2e-3, rtol=2e-3), "causal mismatch"

    # 2) non-causal path (zero additive bias)
    out_nc = jax.block_until_ready(
        single_attention(seq, pos_enc, time_enc, wq, wk, causality=False))
    assert jnp.allclose(out_nc, ref_nc, atol=2e-3, rtol=2e-3), \
        "non-causal mismatch"

    # 3) bf16 MXU operands (the production-size optimization), looser tolerance.
    out_bf16 = jax.block_until_ready(
        single_attention(seq, pos_enc, time_enc, wq, wk, causality=True,
                         matmul_dtype=jnp.bfloat16))
    assert jnp.allclose(out_bf16, ref_c, atol=5e-2, rtol=5e-2), \
        "bf16 path mismatch"

    print("KERNEL_OK")
</pallas_src>

<mosaic_0001>
module attributes {stable_mosaic.version = 11 : i64} {
  func.func @_single_attention_kernel(%arg0: i32, %arg1: memref<2x8x16xf32, #tpu.memory_space<vmem>>, %arg2: memref<2x8x16xf32, #tpu.memory_space<vmem>>, %arg3: memref<16x64xf32, #tpu.memory_space<vmem>>, %arg4: memref<16x64xf32, #tpu.memory_space<vmem>>, %arg5: memref<8x8xf32, #tpu.memory_space<vmem>>, %arg6: memref<2x8x16xf32, #tpu.memory_space<vmem>>) attributes {dimension_semantics = [#tpu.dimension_semantics<parallel>], iteration_bounds = array<i64: 1>, scalar_prefetch = 0 : i64, scratch_operands = 0 : i64, tpu.core_type = #tpu.core_type<tc>, window_params = [{transform_indices = @transform_0, window_bounds = array<i64: 2, 8, 16>}, {transform_indices = @transform_1, window_bounds = array<i64: 2, 8, 16>}, {pipeline_mode = #tpu.pipeline_mode<synchronous>, transform_indices = @transform_2, window_bounds = array<i64: 16, 64>}, {pipeline_mode = #tpu.pipeline_mode<synchronous>, transform_indices = @transform_3, window_bounds = array<i64: 16, 64>}, {pipeline_mode = #tpu.pipeline_mode<synchronous>, transform_indices = @transform_4, window_bounds = array<i64: 8, 8>}, {transform_indices = @transform_5, window_bounds = array<i64: 2, 8, 16>}]} {
    %c0 = arith.constant 0 : index
    %c0_0 = arith.constant 0 : index
    %c0_1 = arith.constant 0 : index
    %0 = vector.load %arg1[%c0, %c0_0, %c0_1] : memref<2x8x16xf32, #tpu.memory_space<vmem>>, vector<2x8x16xf32>
    %c0_2 = arith.constant 0 : index
    %c0_3 = arith.constant 0 : index
    %c0_4 = arith.constant 0 : index
    %1 = vector.load %arg2[%c0_2, %c0_3, %c0_4] : memref<2x8x16xf32, #tpu.memory_space<vmem>>, vector<2x8x16xf32>
    %2 = vector.shape_cast %0 : vector<2x8x16xf32> to vector<16x16xf32>
    %3 = vector.shape_cast %1 : vector<2x8x16xf32> to vector<16x16xf32>
    %c0_5 = arith.constant 0 : index
    %c0_6 = arith.constant 0 : index
    %4 = vector.load %arg3[%c0_5, %c0_6] : memref<16x64xf32, #tpu.memory_space<vmem>>, vector<16x64xf32>
    %cst = arith.constant dense<0.000000e+00> : vector<16x64xf32>
    %5 = tpu.matmul %2, %4, %cst {dimension_numbers = #tpu.dot_dimension_numbers<[1], [0], [0], [1], [0, 0, 1, 1], [], []>} : vector<16x16xf32>, vector<16x64xf32>, vector<16x64xf32> -> vector<16x64xf32>
    %c0_7 = arith.constant 0 : index
    %c0_8 = arith.constant 0 : index
    %6 = vector.load %arg4[%c0_7, %c0_8] : memref<16x64xf32, #tpu.memory_space<vmem>>, vector<16x64xf32>
    %cst_9 = arith.constant dense<0.000000e+00> : vector<16x64xf32>
    %7 = tpu.matmul %3, %6, %cst_9 {dimension_numbers = #tpu.dot_dimension_numbers<[1], [0], [0], [1], [0, 0, 1, 1], [], []>} : vector<16x16xf32>, vector<16x64xf32>, vector<16x64xf32> -> vector<16x64xf32>
    %8 = arith.addf %5, %7 : vector<16x64xf32>
    %9 = vector.shape_cast %8 : vector<16x64xf32> to vector<2x8x64xf32>
    %10 = vector.extract_strided_slice %9 {offsets = [0, 0, 0], sizes = [2, 8, 32], strides = [1, 1, 1]} : vector<2x8x64xf32> to vector<2x8x32xf32>
    %11 = vector.extract_strided_slice %9 {offsets = [0, 0, 32], sizes = [2, 8, 32], strides = [1, 1, 1]} : vector<2x8x64xf32> to vector<2x8x32xf32>
    "tpu.trace_start"() <{level = 10 : i32, message = "bqd,bkd->bqk"}> : () -> ()
    %cst_10 = arith.constant dense<0.000000e+00> : vector<2x8x8xf32>
    %12 = tpu.matmul %10, %11, %cst_10 {dimension_numbers = #tpu.dot_dimension_numbers<[2], [2], [1], [1], [0, 0, 0, 1, 1, 1], [0], [0]>} : vector<2x8x32xf32>, vector<2x8x32xf32>, vector<2x8x8xf32> -> vector<2x8x8xf32>
    "tpu.trace_stop"() : () -> ()
    %cst_11 = arith.constant 1.000000e+01 : f32
    %13 = vector.broadcast %cst_11 : f32 to vector<2x8x8xf32>
    %14 = arith.minimumf %12, %13 : vector<2x8x8xf32>
    %c0_12 = arith.constant 0 : index
    %c0_13 = arith.constant 0 : index
    %15 = vector.load %arg5[%c0_12, %c0_13] : memref<8x8xf32, #tpu.memory_space<vmem>>, vector<8x8xf32>
    %16 = vector.shape_cast %15 : vector<8x8xf32> to vector<1x8x8xf32>
    %17 = vector.broadcast %16 : vector<1x8x8xf32> to vector<2x8x8xf32>
    %18 = arith.addf %14, %17 : vector<2x8x8xf32>
    %cst_14 = arith.constant dense<0xFF800000> : vector<2x8xf32>
    %19 = vector.multi_reduction <maximumf>, %18, %cst_14 [2] : vector<2x8x8xf32> to vector<2x8xf32>
    %20 = vector.shape_cast %19 : vector<2x8xf32> to vector<2x8x1xf32>
    %21 = vector.broadcast %20 : vector<2x8x1xf32> to vector<2x8x8xf32>
    %22 = arith.subf %18, %21 : vector<2x8x8xf32>
    %23 = math.exp %22 : vector<2x8x8xf32>
    %cst_15 = arith.constant dense<0.000000e+00> : vector<2x8xf32>
    %24 = vector.multi_reduction <add>, %23, %cst_15 [2] : vector<2x8x8xf32> to vector<2x8xf32>
    %25 = vector.shape_cast %24 : vector<2x8xf32> to vector<2x8x1xf32>
    %26 = tpu.reciprocal %25 {approx = true} : vector<2x8x1xf32> -> vector<2x8x1xf32>
    %27 = vector.broadcast %26 : vector<2x8x1xf32> to vector<2x8x8xf32>
    %28 = arith.mulf %23, %27 : vector<2x8x8xf32>
    "tpu.trace_start"() <{level = 10 : i32, message = "bqk,bkf->bqf"}> : () -> ()
    %cst_16 = arith.constant dense<0.000000e+00> : vector<2x8x16xf32>
    %29 = tpu.matmul %28, %0, %cst_16 {dimension_numbers = #tpu.dot_dimension_numbers<[2], [1], [1], [2], [0, 0, 0, 1, 1, 2], [0], [0]>} : vector<2x8x8xf32>, vector<2x8x16xf32>, vector<2x8x16xf32> -> vector<2x8x16xf32>
    "tpu.trace_stop"() : () -> ()
    %c0_17 = arith.constant 0 : index
    %c0_18 = arith.constant 0 : index
    %c0_19 = arith.constant 0 : index
    %30 = vector.load %arg6[%c0_17, %c0_18, %c0_19] : memref<2x8x16xf32, #tpu.memory_space<vmem>>, vector<2x8x16xf32>
    tpu.vector_store %arg6[%c0_17, %c0_18, %c0_19], %29 {strides = array<i32>} : memref<2x8x16xf32, #tpu.memory_space<vmem>>, vector<2x8x16xf32>,
    return
  }
  func.func @transform_0(%arg0: i32) -> (i32, i32, i32) {
    %c0_i32 = arith.constant 0 : i32
    %c0_i32_0 = arith.constant 0 : i32
    %c0_i32_1 = arith.constant 0 : i32
    return %arg0, %c0_i32, %c0_i32_0 : i32, i32, i32
  }
  func.func @transform_1(%arg0: i32) -> (i32, i32, i32) {
    %c0_i32 = arith.constant 0 : i32
    %c0_i32_0 = arith.constant 0 : i32
    %c0_i32_1 = arith.constant 0 : i32
    return %arg0, %c0_i32, %c0_i32_0 : i32, i32, i32
  }
  func.func @transform_2(%arg0: i32) -> (i32, i32) {
    %c0_i32 = arith.constant 0 : i32
    %c0_i32_0 = arith.constant 0 : i32
    %c0_i32_1 = arith.constant 0 : i32
    return %c0_i32, %c0_i32_0 : i32, i32
  }
  func.func @transform_3(%arg0: i32) -> (i32, i32) {
    %c0_i32 = arith.constant 0 : i32
    %c0_i32_0 = arith.constant 0 : i32
    %c0_i32_1 = arith.constant 0 : i32
    return %c0_i32, %c0_i32_0 : i32, i32
  }
  func.func @transform_4(%arg0: i32) -> (i32, i32) {
    %c0_i32 = arith.constant 0 : i32
    %c0_i32_0 = arith.constant 0 : i32
    %c0_i32_1 = arith.constant 0 : i32
    return %c0_i32, %c0_i32_0 : i32, i32
  }
  func.func @transform_5(%arg0: i32) -> (i32, i32, i32) {
    %c0_i32 = arith.constant 0 : i32
    %c0_i32_0 = arith.constant 0 : i32
    %c0_i32_1 = arith.constant 0 : i32
    return %arg0, %c0_i32, %c0_i32_0 : i32, i32, i32
  }
}

module attributes {stable_mosaic.version = 11 : i64} {
  func.func @_single_attention_kernel(%arg0: i32, %arg1: memref<2x8x16xf32, #tpu.memory_space<vmem>>, %arg2: memref<2x8x16xf32, #tpu.memory_space<vmem>>, %arg3: memref<16x64xf32, #tpu.memory_space<vmem>>, %arg4: memref<16x64xf32, #tpu.memory_space<vmem>>, %arg5: memref<8x8xf32, #tpu.memory_space<vmem>>, %arg6: memref<2x8x16xf32, #tpu.memory_space<vmem>>) attributes {dimension_semantics = [#tpu.dimension_semantics<parallel>], iteration_bounds = array<i64: 1>, scalar_prefetch = 0 : i64, scratch_operands = 0 : i64, tpu.core_type = #tpu.core_type<tc>, window_params = [{transform_indices = @transform_0, window_bounds = array<i64: 2, 8, 16>}, {transform_indices = @transform_1, window_bounds = array<i64: 2, 8, 16>}, {pipeline_mode = #tpu.pipeline_mode<synchronous>, transform_indices = @transform_2, window_bounds = array<i64: 16, 64>}, {pipeline_mode = #tpu.pipeline_mode<synchronous>, transform_indices = @transform_3, window_bounds = array<i64: 16, 64>}, {pipeline_mode = #tpu.pipeline_mode<synchronous>, transform_indices = @transform_4, window_bounds = array<i64: 8, 8>}, {transform_indices = @transform_5, window_bounds = array<i64: 2, 8, 16>}]} {
    %c0 = arith.constant 0 : index
    %c0_0 = arith.constant 0 : index
    %c0_1 = arith.constant 0 : index
    %0 = vector.load %arg1[%c0, %c0_0, %c0_1] : memref<2x8x16xf32, #tpu.memory_space<vmem>>, vector<2x8x16xf32>
    %c0_2 = arith.constant 0 : index
    %c0_3 = arith.constant 0 : index
    %c0_4 = arith.constant 0 : index
    %1 = vector.load %arg2[%c0_2, %c0_3, %c0_4] : memref<2x8x16xf32, #tpu.memory_space<vmem>>, vector<2x8x16xf32>
    %2 = vector.shape_cast %0 : vector<2x8x16xf32> to vector<16x16xf32>
    %3 = vector.shape_cast %1 : vector<2x8x16xf32> to vector<16x16xf32>
    %c0_5 = arith.constant 0 : index
    %c0_6 = arith.constant 0 : index
    %4 = vector.load %arg3[%c0_5, %c0_6] : memref<16x64xf32, #tpu.memory_space<vmem>>, vector<16x64xf32>
    %cst = arith.constant dense<0.000000e+00> : vector<16x64xf32>
    %5 = tpu.matmul %2, %4, %cst {dimension_numbers = #tpu.dot_dimension_numbers<[1], [0], [0], [1], [0, 0, 1, 1], [], []>} : vector<16x16xf32>, vector<16x64xf32>, vector<16x64xf32> -> vector<16x64xf32>
    %c0_7 = arith.constant 0 : index
    %c0_8 = arith.constant 0 : index
    %6 = vector.load %arg4[%c0_7, %c0_8] : memref<16x64xf32, #tpu.memory_space<vmem>>, vector<16x64xf32>
    %cst_9 = arith.constant dense<0.000000e+00> : vector<16x64xf32>
    %7 = tpu.matmul %3, %6, %cst_9 {dimension_numbers = #tpu.dot_dimension_numbers<[1], [0], [0], [1], [0, 0, 1, 1], [], []>} : vector<16x16xf32>, vector<16x64xf32>, vector<16x64xf32> -> vector<16x64xf32>
    %8 = arith.addf %5, %7 : vector<16x64xf32>
    %9 = vector.shape_cast %8 : vector<16x64xf32> to vector<2x8x64xf32>
    %10 = vector.extract_strided_slice %9 {offsets = [0, 0, 0], sizes = [2, 8, 32], strides = [1, 1, 1]} : vector<2x8x64xf32> to vector<2x8x32xf32>
    %11 = vector.extract_strided_slice %9 {offsets = [0, 0, 32], sizes = [2, 8, 32], strides = [1, 1, 1]} : vector<2x8x64xf32> to vector<2x8x32xf32>
    "tpu.trace_start"() <{level = 10 : i32, message = "bqd,bkd->bqk"}> : () -> ()
    %cst_10 = arith.constant dense<0.000000e+00> : vector<2x8x8xf32>
    %12 = tpu.matmul %10, %11, %cst_10 {dimension_numbers = #tpu.dot_dimension_numbers<[2], [2], [1], [1], [0, 0, 0, 1, 1, 1], [0], [0]>} : vector<2x8x32xf32>, vector<2x8x32xf32>, vector<2x8x8xf32> -> vector<2x8x8xf32>
    "tpu.trace_stop"() : () -> ()
    %cst_11 = arith.constant 1.000000e+01 : f32
    %13 = vector.broadcast %cst_11 : f32 to vector<2x8x8xf32>
    %14 = arith.minimumf %12, %13 : vector<2x8x8xf32>
    %c0_12 = arith.constant 0 : index
    %c0_13 = arith.constant 0 : index
    %15 = vector.load %arg5[%c0_12, %c0_13] : memref<8x8xf32, #tpu.memory_space<vmem>>, vector<8x8xf32>
    %16 = vector.shape_cast %15 : vector<8x8xf32> to vector<1x8x8xf32>
    %17 = vector.broadcast %16 : vector<1x8x8xf32> to vector<2x8x8xf32>
    %18 = arith.addf %14, %17 : vector<2x8x8xf32>
    %cst_14 = arith.constant dense<0xFF800000> : vector<2x8xf32>
    %19 = vector.multi_reduction <maximumf>, %18, %cst_14 [2] : vector<2x8x8xf32> to vector<2x8xf32>
    %20 = vector.shape_cast %19 : vector<2x8xf32> to vector<2x8x1xf32>
    %21 = vector.broadcast %20 : vector<2x8x1xf32> to vector<2x8x8xf32>
    %22 = arith.subf %18, %21 : vector<2x8x8xf32>
    %23 = math.exp %22 : vector<2x8x8xf32>
    %cst_15 = arith.constant dense<0.000000e+00> : vector<2x8xf32>
    %24 = vector.multi_reduction <add>, %23, %cst_15 [2] : vector<2x8x8xf32> to vector<2x8xf32>
    %25 = vector.shape_cast %24 : vector<2x8xf32> to vector<2x8x1xf32>
    %26 = tpu.reciprocal %25 {approx = true} : vector<2x8x1xf32> -> vector<2x8x1xf32>
    %27 = vector.broadcast %26 : vector<2x8x1xf32> to vector<2x8x8xf32>
    %28 = arith.mulf %23, %27 : vector<2x8x8xf32>
    "tpu.trace_start"() <{level = 10 : i32, message = "bqk,bkf->bqf"}> : () -> ()
    %cst_16 = arith.constant dense<0.000000e+00> : vector<2x8x16xf32>
    %29 = tpu.matmul %28, %0, %cst_16 {dimension_numbers = #tpu.dot_dimension_numbers<[2], [1], [1], [2], [0, 0, 0, 1, 1, 2], [0], [0]>} : vector<2x8x8xf32>, vector<2x8x16xf32>, vector<2x8x16xf32> -> vector<2x8x16xf32>
    "tpu.trace_stop"() : () -> ()
    %c0_17 = arith.constant 0 : index
    %c0_18 = arith.constant 0 : index
    %c0_19 = arith.constant 0 : index
    %30 = vector.load %arg6[%c0_17, %c0_18, %c0_19] : memref<2x8x16xf32, #tpu.memory_space<vmem>>, vector<2x8x16xf32>
    tpu.vector_store %arg6[%c0_17, %c0_18, %c0_19], %29 {strides = array<i32>} : memref<2x8x16xf32, #tpu.memory_space<vmem>>, vector<2x8x16xf32>,
    return
  }
  func.func @transform_0(%arg0: i32) -> (i32, i32, i32) {
    %c0_i32 = arith.constant 0 : i32
    %c0_i32_0 = arith.constant 0 : i32
    %c0_i32_1 = arith.constant 0 : i32
    return %arg0, %c0_i32, %c0_i32_0 : i32, i32, i32
  }
  func.func @transform_1(%arg0: i32) -> (i32, i32, i32) {
    %c0_i32 = arith.constant 0 : i32
    %c0_i32_0 = arith.constant 0 : i32
    %c0_i32_1 = arith.constant 0 : i32
    return %arg0, %c0_i32, %c0_i32_0 : i32, i32, i32
  }
  func.func @transform_2(%arg0: i32) -> (i32, i32) {
    %c0_i32 = arith.constant 0 : i32
    %c0_i32_0 = arith.constant 0 : i32
    %c0_i32_1 = arith.constant 0 : i32
    return %c0_i32, %c0_i32_0 : i32, i32
  }
  func.func @transform_3(%arg0: i32) -> (i32, i32) {
    %c0_i32 = arith.constant 0 : i32
    %c0_i32_0 = arith.constant 0 : i32
    %c0_i32_1 = arith.constant 0 : i32
    return %c0_i32, %c0_i32_0 : i32, i32
  }
  func.func @transform_4(%arg0: i32) -> (i32, i32) {
    %c0_i32 = arith.constant 0 : i32
    %c0_i32_0 = arith.constant 0 : i32
    %c0_i32_1 = arith.constant 0 : i32
    return %c0_i32, %c0_i32_0 : i32, i32
  }
  func.func @transform_5(%arg0: i32) -> (i32, i32, i32) {
    %c0_i32 = arith.constant 0 : i32
    %c0_i32_0 = arith.constant 0 : i32
    %c0_i32_1 = arith.constant 0 : i32
    return %arg0, %c0_i32, %c0_i32_0 : i32, i32, i32
  }
}

</mosaic_0001>

<llo_original>
// kernel: tpu_custom_call.1
$region0: #{tpu_custom_call.1}
  #allocation0 [shape = 'u32[]', space=smem, size = 0x4, offset = 0x4, fixed_abs, tag = 'smem constant byte address 0x4 - core index']
  #allocation1 [shape = 'u32[144,128]{1,0:T(1,128)}', space=vmem, size = 0x12000, scoped, tag = 'internal scratch']
  %s0 = inlined_call_operand.hbm [shape: f32[2,8,16], index: 0, kind: input, shape index: {}]
  %s1 = inlined_call_operand.hbm [shape: f32[2,8,16], index: 1, kind: input, shape index: {}]
  %s2 = inlined_call_operand.hbm [shape: f32[16,64], index: 2, kind: input, shape index: {}]
  %s3 = inlined_call_operand.hbm [shape: f32[16,64], index: 3, kind: input, shape index: {}]
  %s4 = inlined_call_operand.hbm [shape: f32[8,8], index: 4, kind: input, shape index: {}]
  %s5 = inlined_call_operand.hbm [shape: f32[2,8,16], index: 5, kind: output, shape index: {}]
  %s6 = sld [smem:[#allocation0]]
  $region50: #{tpu_custom_call.1} parent=0
    _
  %s8 = ssub.s32 1, %s6
  %s9 = scalar_select 0, %s8, %s6
  $region1: #{tpu_custom_call.1} parent=0
    #allocation2 [shape = 'u8[8192]{0}', space=vmem, size = 0x2000, scoped, tag = 'input window, operand 0, single buffered']
    #allocation3 [shape = 's32[1]{0}', space=sflag, size = 0x4, scoped, tag = 'scoped memory for tpu_custom_call.1']
    #allocation4 [shape = 's32[1]{0}', space=sflag, size = 0x4, scoped, tag = 'scoped memory for tpu_custom_call.1']
    #allocation5 [shape = 'u8[8192]{0}', space=vmem, size = 0x2000, scoped, tag = 'input window, operand 1, single buffered']
    #allocation6 [shape = 's32[1]{0}', space=sflag, size = 0x4, scoped, tag = 'scoped memory for tpu_custom_call.1']
    #allocation7 [shape = 'u8[8192]{0}', space=vmem, size = 0x2000, scoped, tag = 'input window, operand 2, single buffered']
    #allocation8 [shape = 'u8[8192]{0}', space=vmem, size = 0x2000, scoped, tag = 'input window, operand 3, single buffered']
    #allocation9 [shape = 's32[1]{0}', space=sflag, size = 0x4, scoped, tag = 'scoped memory for tpu_custom_call.1']
    #allocation10 [shape = 'u8[4096]{0}', space=vmem, size = 0x1000, scoped, tag = 'input window, operand 4, single buffered']
    #allocation11 [shape = 'u8[8192]{0}', space=vmem, size = 0x2000, scoped, tag = 'output window, operand 0, single buffered']
    %10 = vsyncpa [#allocation3], 0
    %11 = vsyncpa [#allocation6], 0
    %12 = vsyncpa [#allocation9], 0
    %13 = vsyncpa [#allocation4], 0
    // Predicated region
    $region2: #{tpu_custom_call.1} parent=1 // pred_check
      _
    $region3: #{tpu_custom_call.1} parent=1 // pred_check_branch
      %15 = sbr.rel (0) target = $region5
    $region4: #{tpu_custom_call.1} parent=1 // pred_region
      %s17 = ssub.s32 256, 256
      %18 = vsyncadd [#allocation3], %s17
      %s19 = sshll.u32 [#allocation2], 4
      %s20 = int_to_ptr.vmem [resolvable:$true] %s19
      %25 = dma.hbm_to_vmem [thread:$0]  %s0, 256, %s20, [#allocation3], 128, 128, 8
    $region5: #{tpu_custom_call.1} parent=1 // pred_fallthru
      _
    // Predicated region
    $region6: #{tpu_custom_call.1} parent=1 // pred_check
      _
    $region7: #{tpu_custom_call.1} parent=1 // pred_check_branch
      %27 = sbr.rel (0) target = $region9
    $region8: #{tpu_custom_call.1} parent=1 // pred_region
      %s29 = ssub.s32 256, 256
      %30 = vsyncadd [#allocation6], %s29
      %s31 = sshll.u32 [#allocation5], 4
      %s32 = int_to_ptr.vmem [resolvable:$true] %s31
      %37 = dma.hbm_to_vmem [thread:$0]  %s1, 256, %s32, [#allocation6], 128, 128, 8
    $region9: #{tpu_custom_call.1} parent=1 // pred_fallthru
      _
    // Predicated region
    $region10: #{tpu_custom_call.1} parent=1 // pred_check
      _
    $region11: #{tpu_custom_call.1} parent=1 // pred_check_branch
      %39 = sbr.rel (0) target = $region13
    $region12: #{tpu_custom_call.1} parent=1 // pred_region
      %s41 = ssub.s32 256, 256
      %42 = vsyncadd [#allocation6], %s41
      %s43 = sshll.u32 [#allocation7], 4
      %s44 = int_to_ptr.vmem [resolvable:$true] %s43
      %49 = dma.hbm_to_vmem [thread:$0]  %s2, 256, %s44, [#allocation6], 128, 128, 8
    $region13: #{tpu_custom_call.1} parent=1 // pred_fallthru
      _
    // Predicated region
    $region14: #{tpu_custom_call.1} parent=1 // pred_check
      _
    $region15: #{tpu_custom_call.1} parent=1 // pred_check_branch
      %51 = sbr.rel (0) target = $region17
    $region16: #{tpu_custom_call.1} parent=1 // pred_region
      %s53 = ssub.s32 256, 256
      %54 = vsyncadd [#allocation9], %s53
      %s55 = sshll.u32 [#allocation8], 4
      %s56 = int_to_ptr.vmem [resolvable:$true] %s55
      %61 = dma.hbm_to_vmem [thread:$0]  %s3, 256, %s56, [#allocation9], 128, 128, 8
    $region17: #{tpu_custom_call.1} parent=1 // pred_fallthru
      _
    // Predicated region
    $region18: #{tpu_custom_call.1} parent=1 // pred_check
      _
    $region19: #{tpu_custom_call.1} parent=1 // pred_check_branch
      %63 = sbr.rel (0) target = $region21
    $region20: #{tpu_custom_call.1} parent=1 // pred_region
      %s65 = ssub.s32 128, 128
      %66 = vsyncadd [#allocation9], %s65
      %s68 = sshll.u32 [#allocation10], 4
      %s69 = int_to_ptr.vmem [resolvable:$true] %s68
      %71 = dma.hbm_to_vmem [thread:$0]  %s4, 128, %s69, [#allocation9]
    $region21: #{tpu_custom_call.1} parent=1 // pred_fallthru
      _
    // Predicated region
    $region22: #{tpu_custom_call.1} parent=1 // pred_check
      _
    $region23: #{tpu_custom_call.1} parent=1 // pred_check_branch
      %73 = sbr.rel (0) target = $region25
    $region24: #{tpu_custom_call.1} parent=1 // pred_region
      %74 = dma.done [#allocation3], 256
    $region25: #{tpu_custom_call.1} parent=1 // pred_fallthru
      _
    // Predicated region
    $region26: #{tpu_custom_call.1} parent=1 // pred_check
      _
    $region27: #{tpu_custom_call.1} parent=1 // pred_check_branch
      %76 = sbr.rel (0) target = $region29
    $region28: #{tpu_custom_call.1} parent=1 // pred_region
      %77 = dma.done [#allocation6], 256
    $region29: #{tpu_custom_call.1} parent=1 // pred_fallthru
      _
    // Predicated region
    $region30: #{tpu_custom_call.1} parent=1 // pred_check
      _
    $region31: #{tpu_custom_call.1} parent=1 // pred_check_branch
      %79 = sbr.rel (0) target = $region33
    $region32: #{tpu_custom_call.1} parent=1 // pred_region
      %80 = dma.done [#allocation6], 256
    $region33: #{tpu_custom_call.1} parent=1 // pred_fallthru
      _
    // Predicated region
    $region34: #{tpu_custom_call.1} parent=1 // pred_check
      _
    $region35: #{tpu_custom_call.1} parent=1 // pred_check_branch
      %82 = sbr.rel (0) target = $region37
    $region36: #{tpu_custom_call.1} parent=1 // pred_region
      %83 = dma.done [#allocation9], 256
    $region37: #{tpu_custom_call.1} parent=1 // pred_fallthru
      _
    // Predicated region
    $region38: #{tpu_custom_call.1} parent=1 // pred_check
      _
    $region39: #{tpu_custom_call.1} parent=1 // pred_check_branch
      %85 = sbr.rel (0) target = $region41
    $region40: #{tpu_custom_call.1} parent=1 // pred_region
      %86 = dma.done [#allocation9], 128
    $region41: #{tpu_custom_call.1} parent=1 // pred_fallthru
      _
    %v87 = vld [vmem:[#allocation2] sm:$0xff]
    %v88 = vld [vmem:[#allocation2 + $0x8] sm:$0xff]
    %v89 = vld [vmem:[#allocation5] sm:$0xff]
    %v90 = vld [vmem:[#allocation5 + $0x8] sm:$0xff]
    %v91 = vld [vmem:[#allocation7] sm:$0xff]
    %v92 = vld [vmem:[#allocation7 + $0x8] sm:$0xff]
    %v93 = vld [vmem:[#allocation8] sm:$0xff]
    %v94 = vld [vmem:[#allocation8 + $0x8] sm:$0xff]
    %vm95 = vcmask 130048
    %v97 = vsel %vm95, %v89, 0
    %v100 = vsel %vm95, %v90, 0
    %102 = vmatprep.subr.mxu0 0.0
    %103 = vmatpush1.msra.mxu0 0.0
    %104 = vmatprep.subr.mxu0 0.0
    %105 = vmatpush1.msra.mxu0 0.0
    %106 = vmatprep.subr.mxu0 0.0
    %107 = vmatpush1.msra.mxu0 0.0
    %108 = vmatprep.subr.mxu0 0.0
    %109 = vmatpush1.msra.mxu0 0.0
    %110 = vmatprep.subr.mxu0 0.0
    %111 = vmatpush1.msra.mxu0 0.0
    %112 = vmatprep.subr.mxu0 0.0
    %113 = vmatpush1.msra.mxu0 0.0
    %114 = vmatprep.subr.mxu0 0.0
    %115 = vmatpush1.msra.mxu0 0.0
    %116 = vmatprep.subr.mxu0 0.0
    %117 = vmatpush1.msra.mxu0 0.0
    %118 = vmatprep.subr.mxu0 0.0
    %119 = vmatpush1.msra.mxu0 0.0
    %120 = vmatprep.subr.mxu0 0.0
    %121 = vmatpush1.msra.mxu0 0.0
    %122 = vmatprep.subr.mxu0 0.0
    %123 = vmatpush1.msra.mxu0 0.0
    %124 = vmatprep.subr.mxu0 0.0
    %125 = vmatpush1.msra.mxu0 0.0
    %126 = vmatprep.subr.mxu0 0.0
    %127 = vmatpush1.msra.mxu0 0.0
    %128 = vmatprep.subr.mxu0 0.0
    %129 = vmatpush1.msra.mxu0 0.0
    %130 = vmatprep.subr.mxu0 0.0
    %131 = vmatpush1.msra.mxu0 %v94
    %132 = vmatprep.subr.mxu0 0.0
    %133 = vmatpush1.msra.mxu0 %v93
    %134 = vmatprep.subr.mxu0 0.0
    %135 = vmatpush2.msra.mxu0 0.0
    %136 = vmatprep.subr.mxu0 0.0
    %137 = vmatpush2.msra.mxu0 0.0
    %138 = vmatprep.subr.mxu0 0.0
    %139 = vmatpush2.msra.mxu0 0.0
    %140 = vmatprep.subr.mxu0 0.0
    %141 = vmatpush2.msra.mxu0 0.0
    %142 = vmatprep.subr.mxu0 0.0
    %143 = vmatpush2.msra.mxu0 0.0
    %144 = vmatprep.subr.mxu0 0.0
    %145 = vmatpush2.msra.mxu0 0.0
    %146 = vmatprep.subr.mxu0 0.0
    %147 = vmatpush2.msra.mxu0 0.0
    %148 = vmatprep.subr.mxu0 0.0
    %149 = vmatpush2.msra.mxu0 0.0
    %150 = vmatprep.subr.mxu0 0.0
    %151 = vmatpush2.msra.mxu0 0.0
    %152 = vmatprep.subr.mxu0 0.0
    %153 = vmatpush2.msra.mxu0 0.0
    %154 = vmatprep.subr.mxu0 0.0
    %155 = vmatpush2.msra.mxu0 0.0
    %156 = vmatprep.subr.mxu0 0.0
    %157 = vmatpush2.msra.mxu0 0.0
    %158 = vmatprep.subr.mxu0 0.0
    %159 = vmatpush2.msra.mxu0 0.0
    %160 = vmatprep.subr.mxu0 0.0
    %161 = vmatpush2.msra.mxu0 0.0
    %162 = vmatprep.subr.mxu0 0.0
    %163 = vmatpush2.msra.mxu0 0.0
    %164 = vmatprep.subr.mxu0 0.0
    %165 = vmatpush2.msra.mxu0 0.0
    %166 = vmatprep.mubr.f32.mxu0 0.0
    %167 = vmatmul.mubr.f32.gmra.mxu0 %v97
    %v168 = vpop.f32.mrf.mxu0
    %v169 = vadd.f32 0.0, %v168
    %v170 = vpop.f32.mrf.mxu0
    %171 = vmatprep.mubr.f32.mxu0 0.0
    %172 = vmatmul.mubr.f32.gmra.mxu0 %v100
    %v173 = vpop.f32.mrf.mxu0
    %v174 = vadd.f32 0.0, %v173
    %v175 = vpop.f32.mrf.mxu0
    %176 = vdwg.mxu0
    %v178 = vsel %vm95, %v87, 0
    %v181 = vsel %vm95, %v88, 0
    %183 = vmatprep.subr.mxu0 0.0
    %184 = vmatpush1.msra.mxu0 0.0
    %185 = vmatprep.subr.mxu0 0.0
    %186 = vmatpush1.msra.mxu0 0.0
    %187 = vmatprep.subr.mxu0 0.0
    %188 = vmatpush1.msra.mxu0 0.0
    %189 = vmatprep.subr.mxu0 0.0
    %190 = vmatpush1.msra.mxu0 0.0
    %191 = vmatprep.subr.mxu0 0.0
    %192 = vmatpush1.msra.mxu0 0.0
    %193 = vmatprep.subr.mxu0 0.0
    %194 = vmatpush1.msra.mxu0 0.0
    %195 = vmatprep.subr.mxu0 0.0
    %196 = vmatpush1.msra.mxu0 0.0
    %197 = vmatprep.subr.mxu0 0.0
    %198 = vmatpush1.msra.mxu0 0.0
    %199 = vmatprep.subr.mxu0 0.0
    %200 = vmatpush1.msra.mxu0 0.0
    %201 = vmatprep.subr.mxu0 0.0
    %202 = vmatpush1.msra.mxu0 0.0
    %203 = vmatprep.subr.mxu0 0.0
    %204 = vmatpush1.msra.mxu0 0.0
    %205 = vmatprep.subr.mxu0 0.0
    %206 = vmatpush1.msra.mxu0 0.0
    %207 = vmatprep.subr.mxu0 0.0
    %208 = vmatpush1.msra.mxu0 0.0
    %209 = vmatprep.subr.mxu0 0.0
    %210 = vmatpush1.msra.mxu0 0.0
    %211 = vmatprep.subr.mxu0 0.0
    %212 = vmatpush1.msra.mxu0 %v92
    %213 = vmatprep.subr.mxu0 0.0
    %214 = vmatpush1.msra.mxu0 %v91
    %215 = vmatprep.subr.mxu0 0.0
    %216 = vmatpush2.msra.mxu0 0.0
    %217 = vmatprep.subr.mxu0 0.0
    %218 = vmatpush2.msra.mxu0 0.0
    %219 = vmatprep.subr.mxu0 0.0
    %220 = vmatpush2.msra.mxu0 0.0
    %221 = vmatprep.subr.mxu0 0.0
    %222 = vmatpush2.msra.mxu0 0.0
    %223 = vmatprep.subr.mxu0 0.0
    %224 = vmatpush2.msra.mxu0 0.0
    %225 = vmatprep.subr.mxu0 0.0
    %226 = vmatpush2.msra.mxu0 0.0
    %227 = vmatprep.subr.mxu0 0.0
    %228 = vmatpush2.msra.mxu0 0.0
    %229 = vmatprep.subr.mxu0 0.0
    %230 = vmatpush2.msra.mxu0 0.0
    %231 = vmatprep.subr.mxu0 0.0
    %232 = vmatpush2.msra.mxu0 0.0
    %233 = vmatprep.subr.mxu0 0.0
    %234 = vmatpush2.msra.mxu0 0.0
    %235 = vmatprep.subr.mxu0 0.0
    %236 = vmatpush2.msra.mxu0 0.0
    %237 = vmatprep.subr.mxu0 0.0
    %238 = vmatpush2.msra.mxu0 0.0
    %239 = vmatprep.subr.mxu0 0.0
    %240 = vmatpush2.msra.mxu0 0.0
    %241 = vmatprep.subr.mxu0 0.0
    %242 = vmatpush2.msra.mxu0 0.0
    %243 = vmatprep.subr.mxu0 0.0
    %244 = vmatpush2.msra.mxu0 0.0
    %245 = vmatprep.subr.mxu0 0.0
    %246 = vmatpush2.msra.mxu0 0.0
    %247 = vmatprep.mubr.f32.mxu0 0.0
    %248 = vmatmul.mubr.f32.gmra.mxu0 %v178
    %v249 = vpop.f32.mrf.mxu0
    %v250 = vadd.f32 %v169, %v249
    %v251 = vpop.f32.mrf.mxu0
    %252 = vmatprep.mubr.f32.mxu0 0.0
    %253 = vmatmul.mubr.f32.gmra.mxu0 %v181
    %v254 = vpop.f32.mrf.mxu0
    %v255 = vadd.f32 %v174, %v254
    %v256 = vpop.f32.mrf.mxu0
    %257 = vdwg.mxu0
    %259 = vrot.lane.b32.xlu0 %v250, 96
    %v260 = vpop.permute.xlu0 %259
    %vm261 = vcmask 261120
    %v262 = vsel %vm261, %v250, 0
    %v264 = vsel %vm261, %v260, 0
    %266 = vmatprep.subr.mxu0 0.0
    %267 = vmatpush1.xpose.msra.mxu0 0.0
    %268 = vmatprep.subr.mxu0 0.0
    %269 = vmatpush1.xpose.msra.mxu0 0.0
    %270 = vmatprep.subr.mxu0 0.0
    %271 = vmatpush1.xpose.msra.mxu0 0.0
    %272 = vmatprep.subr.mxu0 0.0
    %273 = vmatpush1.xpose.msra.mxu0 0.0
    %274 = vmatprep.subr.mxu0 0.0
    %275 = vmatpush1.xpose.msra.mxu0 0.0
    %276 = vmatprep.subr.mxu0 0.0
    %277 = vmatpush1.xpose.msra.mxu0 0.0
    %278 = vmatprep.subr.mxu0 0.0
    %279 = vmatpush1.xpose.msra.mxu0 0.0
    %280 = vmatprep.subr.mxu0 0.0
    %281 = vmatpush1.xpose.msra.mxu0 0.0
    %282 = vmatprep.subr.mxu0 0.0
    %283 = vmatpush1.xpose.msra.mxu0 0.0
    %284 = vmatprep.subr.mxu0 0.0
    %285 = vmatpush1.xpose.msra.mxu0 0.0
    %286 = vmatprep.subr.mxu0 0.0
    %287 = vmatpush1.xpose.msra.mxu0 0.0
    %288 = vmatprep.subr.mxu0 0.0
    %289 = vmatpush1.xpose.msra.mxu0 0.0
    %290 = vmatprep.subr.mxu0 0.0
    %291 = vmatpush1.xpose.msra.mxu0 0.0
    %292 = vmatprep.subr.mxu0 0.0
    %293 = vmatpush1.xpose.msra.mxu0 0.0
    %294 = vmatprep.subr.mxu0 0.0
    %295 = vmatpush1.xpose.msra.mxu0 0.0
    %296 = vmatprep.subr.mxu0 0.0
    %297 = vmatpush1.xpose.msra.mxu0 %v264
    %298 = vmatprep.subr.mxu0 0.0
    %299 = vmatpush2.xpose.msra.mxu0 0.0
    %300 = vmatprep.subr.mxu0 0.0
    %301 = vmatpush2.xpose.msra.mxu0 0.0
    %302 = vmatprep.subr.mxu0 0.0
    %303 = vmatpush2.xpose.msra.mxu0 0.0
    %304 = vmatprep.subr.mxu0 0.0
    %305 = vmatpush2.xpose.msra.mxu0 0.0
    %306 = vmatprep.subr.mxu0 0.0
    %307 = vmatpush2.xpose.msra.mxu0 0.0
    %308 = vmatprep.subr.mxu0 0.0
    %309 = vmatpush2.xpose.msra.mxu0 0.0
    %310 = vmatprep.subr.mxu0 0.0
    %311 = vmatpush2.xpose.msra.mxu0 0.0
    %312 = vmatprep.subr.mxu0 0.0
    %313 = vmatpush2.xpose.msra.mxu0 0.0
    %314 = vmatprep.subr.mxu0 0.0
    %315 = vmatpush2.xpose.msra.mxu0 0.0
    %316 = vmatprep.subr.mxu0 0.0
    %317 = vmatpush2.xpose.msra.mxu0 0.0
    %318 = vmatprep.subr.mxu0 0.0
    %319 = vmatpush2.xpose.msra.mxu0 0.0
    %320 = vmatprep.subr.mxu0 0.0
    %321 = vmatpush2.xpose.msra.mxu0 0.0
    %322 = vmatprep.subr.mxu0 0.0
    %323 = vmatpush2.xpose.msra.mxu0 0.0
    %324 = vmatprep.subr.mxu0 0.0
    %325 = vmatpush2.xpose.msra.mxu0 0.0
    %326 = vmatprep.subr.mxu0 0.0
    %327 = vmatpush2.xpose.msra.mxu0 0.0
    %328 = vmatprep.subr.mxu0 0.0
    %329 = vmatpush2.xpose.msra.mxu0 0.0
    %330 = vmatprep.mubr.f32.mxu0 0.0
    %331 = vmatmul.mubr.f32.gmra.mxu0 %v262
    %v332 = vpop.f32.mrf.mxu0
    %v333 = vadd.f32 0.0, %v332
    %v334 = vpop.f32.mrf.mxu0
    %335 = vdwg.mxu0
    %337 = vrot.lane.b32.xlu0 %v255, 96
    %v338 = vpop.permute.xlu0 %337
    %v339 = vsel %vm261, %v255, 0
    %v341 = vsel %vm261, %v338, 0
    %343 = vmatprep.subr.mxu0 0.0
    %344 = vmatpush1.xpose.msra.mxu0 0.0
    %345 = vmatprep.subr.mxu0 0.0
    %346 = vmatpush1.xpose.msra.mxu0 0.0
    %347 = vmatprep.subr.mxu0 0.0
    %348 = vmatpush1.xpose.msra.mxu0 0.0
    %349 = vmatprep.subr.mxu0 0.0
    %350 = vmatpush1.xpose.msra.mxu0 0.0
    %351 = vmatprep.subr.mxu0 0.0
    %352 = vmatpush1.xpose.msra.mxu0 0.0
    %353 = vmatprep.subr.mxu0 0.0
    %354 = vmatpush1.xpose.msra.mxu0 0.0
    %355 = vmatprep.subr.mxu0 0.0
    %356 = vmatpush1.xpose.msra.mxu0 0.0
    %357 = vmatprep.subr.mxu0 0.0
    %358 = vmatpush1.xpose.msra.mxu0 0.0
    %359 = vmatprep.subr.mxu0 0.0
    %360 = vmatpush1.xpose.msra.mxu0 0.0
    %361 = vmatprep.subr.mxu0 0.0
    %362 = vmatpush1.xpose.msra.mxu0 0.0
    %363 = vmatprep.subr.mxu0 0.0
    %364 = vmatpush1.xpose.msra.mxu0 0.0
    %365 = vmatprep.subr.mxu0 0.0
    %366 = vmatpush1.xpose.msra.mxu0 0.0
    %367 = vmatprep.subr.mxu0 0.0
    %368 = vmatpush1.xpose.msra.mxu0 0.0
    %369 = vmatprep.subr.mxu0 0.0
    %370 = vmatpush1.xpose.msra.mxu0 0.0
    %371 = vmatprep.subr.mxu0 0.0
    %372 = vmatpush1.xpose.msra.mxu0 0.0
    %373 = vmatprep.subr.mxu0 0.0
    %374 = vmatpush1.xpose.msra.mxu0 %v341
    %375 = vmatprep.subr.mxu0 0.0
    %376 = vmatpush2.xpose.msra.mxu0 0.0
    %377 = vmatprep.subr.mxu0 0.0
    %378 = vmatpush2.xpose.msra.mxu0 0.0
    %379 = vmatprep.subr.mxu0 0.0
    %380 = vmatpush2.xpose.msra.mxu0 0.0
    %381 = vmatprep.subr.mxu0 0.0
    %382 = vmatpush2.xpose.msra.mxu0 0.0
    %383 = vmatprep.subr.mxu0 0.0
    %384 = vmatpush2.xpose.msra.mxu0 0.0
    %385 = vmatprep.subr.mxu0 0.0
    %386 = vmatpush2.xpose.msra.mxu0 0.0
    %387 = vmatprep.subr.mxu0 0.0
    %388 = vmatpush2.xpose.msra.mxu0 0.0
    %389 = vmatprep.subr.mxu0 0.0
    %390 = vmatpush2.xpose.msra.mxu0 0.0
    %391 = vmatprep.subr.mxu0 0.0
    %392 = vmatpush2.xpose.msra.mxu0 0.0
    %393 = vmatprep.subr.mxu0 0.0
    %394 = vmatpush2.xpose.msra.mxu0 0.0
    %395 = vmatprep.subr.mxu0 0.0
    %396 = vmatpush2.xpose.msra.mxu0 0.0
    %397 = vmatprep.subr.mxu0 0.0
    %398 = vmatpush2.xpose.msra.mxu0 0.0
    %399 = vmatprep.subr.mxu0 0.0
    %400 = vmatpush2.xpose.msra.mxu0 0.0
    %401 = vmatprep.subr.mxu0 0.0
    %402 = vmatpush2.xpose.msra.mxu0 0.0
    %403 = vmatprep.subr.mxu0 0.0
    %404 = vmatpush2.xpose.msra.mxu0 0.0
    %405 = vmatprep.subr.mxu0 0.0
    %406 = vmatpush2.xpose.msra.mxu0 0.0
    %407 = vmatprep.mubr.f32.mxu0 0.0
    %408 = vmatmul.mubr.f32.gmra.mxu0 %v339
    %v409 = vpop.f32.mrf.mxu0
    %v410 = vadd.f32 0.0, %v409
    %v411 = vpop.f32.mrf.mxu0
    %412 = vdwg.mxu0
    %v413 = vmin.f32 %v333, 10.0
    %v414 = vmin.f32 %v410, 10.0
    %v415 = vld [vmem:[#allocation10] sm:$0xff]
    %v416 = vadd.f32 %v413, %v415
    %v417 = vadd.f32 %v414, %v415
    %vm418 = vcmask 64512
    %v419 = vsel %vm418, %v416, -inf
    %420 = vmax.xlane.f32.xlu0 %v419
    %v421 = vpop.xlane.xlu0 %420
    %v422 = vsel %vm418, %v417, -inf
    %423 = vmax.xlane.f32.xlu0 %v422
    %v424 = vpop.xlane.xlu0 %423
    %v425 = vsub.f32 %v416, %v421
    %v426 = vsub.f32 %v417, %v424
    %v427 = vmul.f32 %v425, 1.442695
    %v428 = vpow.pop %v427
    %v429 = vmul.f32 %v426, 1.442695
    %v430 = vpow.pop %v429
    %v431 = vsel %vm418, %v428, 0.0
    %432 = vadd.xlane.f32.xlu0 %v431
    %v433 = vpop.xlane.xlu0 %432
    %v434 = vsel %vm418, %v430, 0.0
    %435 = vadd.xlane.f32.xlu0 %v434
    %v436 = vpop.xlane.xlu0 %435
    %v437 = vrcp.pop %v433
    %v438 = vrcp.pop %v436
    %v439 = vmul.f32 %v428, %v437
    %v440 = vmul.f32 %v430, %v438
    %v442 = vsel %vm418, %v439, 0
    %444 = vmatprep.subr.mxu0 0.0
    %445 = vmatpush1.msra.mxu0 0.0
    %446 = vmatprep.subr.mxu0 0.0
    %447 = vmatpush1.msra.mxu0 0.0
    %448 = vmatprep.subr.mxu0 0.0
    %449 = vmatpush1.msra.mxu0 0.0
    %450 = vmatprep.subr.mxu0 0.0
    %451 = vmatpush1.msra.mxu0 0.0
    %452 = vmatprep.subr.mxu0 0.0
    %453 = vmatpush1.msra.mxu0 0.0
    %454 = vmatprep.subr.mxu0 0.0
    %455 = vmatpush1.msra.mxu0 0.0
    %456 = vmatprep.subr.mxu0 0.0
    %457 = vmatpush1.msra.mxu0 0.0
    %458 = vmatprep.subr.mxu0 0.0
    %459 = vmatpush1.msra.mxu0 0.0
    %460 = vmatprep.subr.mxu0 0.0
    %461 = vmatpush1.msra.mxu0 0.0
    %462 = vmatprep.subr.mxu0 0.0
    %463 = vmatpush1.msra.mxu0 0.0
    %464 = vmatprep.subr.mxu0 0.0
    %465 = vmatpush1.msra.mxu0 0.0
    %466 = vmatprep.subr.mxu0 0.0
    %467 = vmatpush1.msra.mxu0 0.0
    %468 = vmatprep.subr.mxu0 0.0
    %469 = vmatpush1.msra.mxu0 0.0
    %470 = vmatprep.subr.mxu0 0.0
    %471 = vmatpush1.msra.mxu0 0.0
    %472 = vmatprep.subr.mxu0 0.0
    %473 = vmatpush1.msra.mxu0 0.0
    %474 = vmatprep.subr.mxu0 0.0
    %475 = vmatpush1.msra.mxu0 %v87
    %476 = vmatprep.subr.mxu0 0.0
    %477 = vmatpush2.msra.mxu0 0.0
    %478 = vmatprep.subr.mxu0 0.0
    %479 = vmatpush2.msra.mxu0 0.0
    %480 = vmatprep.subr.mxu0 0.0
    %481 = vmatpush2.msra.mxu0 0.0
    %482 = vmatprep.subr.mxu0 0.0
    %483 = vmatpush2.msra.mxu0 0.0
    %484 = vmatprep.subr.mxu0 0.0
    %485 = vmatpush2.msra.mxu0 0.0
    %486 = vmatprep.subr.mxu0 0.0
    %487 = vmatpush2.msra.mxu0 0.0
    %488 = vmatprep.subr.mxu0 0.0
    %489 = vmatpush2.msra.mxu0 0.0
    %490 = vmatprep.subr.mxu0 0.0
    %491 = vmatpush2.msra.mxu0 0.0
    %492 = vmatprep.subr.mxu0 0.0
    %493 = vmatpush2.msra.mxu0 0.0
    %494 = vmatprep.subr.mxu0 0.0
    %495 = vmatpush2.msra.mxu0 0.0
    %496 = vmatprep.subr.mxu0 0.0
    %497 = vmatpush2.msra.mxu0 0.0
    %498 = vmatprep.subr.mxu0 0.0
    %499 = vmatpush2.msra.mxu0 0.0
    %500 = vmatprep.subr.mxu0 0.0
    %501 = vmatpush2.msra.mxu0 0.0
    %502 = vmatprep.subr.mxu0 0.0
    %503 = vmatpush2.msra.mxu0 0.0
    %504 = vmatprep.subr.mxu0 0.0
    %505 = vmatpush2.msra.mxu0 0.0
    %506 = vmatprep.subr.mxu0 0.0
    %507 = vmatpush2.msra.mxu0 0.0
    %508 = vmatprep.mubr.f32.mxu0 0.0
    %509 = vmatmul.mubr.f32.gmra.mxu0 %v442
    %v510 = vpop.f32.mrf.mxu0
    %v511 = vadd.f32 0.0, %v510
    %v512 = vpop.f32.mrf.mxu0
    %513 = vdwg.mxu0
    %v515 = vsel %vm418, %v440, 0
    %517 = vmatprep.subr.mxu0 0.0
    %518 = vmatpush1.msra.mxu0 0.0
    %519 = vmatprep.subr.mxu0 0.0
    %520 = vmatpush1.msra.mxu0 0.0
    %521 = vmatprep.subr.mxu0 0.0
    %522 = vmatpush1.msra.mxu0 0.0
    %523 = vmatprep.subr.mxu0 0.0
    %524 = vmatpush1.msra.mxu0 0.0
    %525 = vmatprep.subr.mxu0 0.0
    %526 = vmatpush1.msra.mxu0 0.0
    %527 = vmatprep.subr.mxu0 0.0
    %528 = vmatpush1.msra.mxu0 0.0
    %529 = vmatprep.subr.mxu0 0.0
    %530 = vmatpush1.msra.mxu0 0.0
    %531 = vmatprep.subr.mxu0 0.0
    %532 = vmatpush1.msra.mxu0 0.0
    %533 = vmatprep.subr.mxu0 0.0
    %534 = vmatpush1.msra.mxu0 0.0
    %535 = vmatprep.subr.mxu0 0.0
    %536 = vmatpush1.msra.mxu0 0.0
    %537 = vmatprep.subr.mxu0 0.0
    %538 = vmatpush1.msra.mxu0 0.0
    %539 = vmatprep.subr.mxu0 0.0
    %540 = vmatpush1.msra.mxu0 0.0
    %541 = vmatprep.subr.mxu0 0.0
    %542 = vmatpush1.msra.mxu0 0.0
    %543 = vmatprep.subr.mxu0 0.0
    %544 = vmatpush1.msra.mxu0 0.0
    %545 = vmatprep.subr.mxu0 0.0
    %546 = vmatpush1.msra.mxu0 0.0
    %547 = vmatprep.subr.mxu0 0.0
    %548 = vmatpush1.msra.mxu0 %v88
    %549 = vmatprep.subr.mxu0 0.0
    %550 = vmatpush2.msra.mxu0 0.0
    %551 = vmatprep.subr.mxu0 0.0
    %552 = vmatpush2.msra.mxu0 0.0
    %553 = vmatprep.subr.mxu0 0.0
    %554 = vmatpush2.msra.mxu0 0.0
    %555 = vmatprep.subr.mxu0 0.0
    %556 = vmatpush2.msra.mxu0 0.0
    %557 = vmatprep.subr.mxu0 0.0
    %558 = vmatpush2.msra.mxu0 0.0
    %559 = vmatprep.subr.mxu0 0.0
    %560 = vmatpush2.msra.mxu0 0.0
    %561 = vmatprep.subr.mxu0 0.0
    %562 = vmatpush2.msra.mxu0 0.0
    %563 = vmatprep.subr.mxu0 0.0
    %564 = vmatpush2.msra.mxu0 0.0
    %565 = vmatprep.subr.mxu0 0.0
    %566 = vmatpush2.msra.mxu0 0.0
    %567 = vmatprep.subr.mxu0 0.0
    %568 = vmatpush2.msra.mxu0 0.0
    %569 = vmatprep.subr.mxu0 0.0
    %570 = vmatpush2.msra.mxu0 0.0
    %571 = vmatprep.subr.mxu0 0.0
    %572 = vmatpush2.msra.mxu0 0.0
    %573 = vmatprep.subr.mxu0 0.0
    %574 = vmatpush2.msra.mxu0 0.0
    %575 = vmatprep.subr.mxu0 0.0
    %576 = vmatpush2.msra.mxu0 0.0
    %577 = vmatprep.subr.mxu0 0.0
    %578 = vmatpush2.msra.mxu0 0.0
    %579 = vmatprep.subr.mxu0 0.0
    %580 = vmatpush2.msra.mxu0 0.0
    %581 = vmatprep.mubr.f32.mxu0 0.0
    %582 = vmatmul.mubr.f32.gmra.mxu0 %v515
    %v583 = vpop.f32.mrf.mxu0
    %v584 = vadd.f32 0.0, %v583
    %v585 = vpop.f32.mrf.mxu0
    %586 = vdwg.mxu0
    %587 = vst.msk [vmem:[#allocation11] sm:$0xff] %vm95, %v511
    %588 = vst.msk [vmem:[#allocation11 + $0x8] sm:$0xff] %vm95, %v584
    // Predicated region
    $region42: #{tpu_custom_call.1} parent=1 // pred_check
      _
    $region43: #{tpu_custom_call.1} parent=1 // pred_check_branch
      %590 = sbr.rel (0) target = $region45
    $region44: #{tpu_custom_call.1} parent=1 // pred_region
      %s592 = ssub.s32 256, 256
      %593 = vsyncadd [#allocation4], %s592
      %s594 = sshll.u32 [#allocation11], 4
      %s595 = int_to_ptr.vmem [resolvable:$true] %s594
      %600 = dma.vmem_to_hbm [thread:$0]  %s595, 256, %s5, [#allocation4], 128, 128, 8
    $region45: #{tpu_custom_call.1} parent=1 // pred_fallthru
      _
    // Predicated region
    $region46: #{tpu_custom_call.1} parent=1 // pred_check
      _
    $region47: #{tpu_custom_call.1} parent=1 // pred_check_branch
      %602 = sbr.rel (0) target = $region49
    $region48: #{tpu_custom_call.1} parent=1 // pred_region
      %603 = dma.done [#allocation4], 256
    $region49: #{tpu_custom_call.1} parent=1 // pred_fallthru
      _
    %604 = vsyncpa [#allocation3], 1
    %605 = vsyncpa [#allocation6], 1
    %606 = vsyncpa [#allocation9], 1
    %607 = vsyncpa [#allocation4], 1

// kernel: tpu_custom_call.1
$region0: #{tpu_custom_call.1}
  #allocation0 [shape = 'u32[]', space=smem, size = 0x4, offset = 0x4, fixed_abs, tag = 'smem constant byte address 0x4 - core index']
  #allocation1 [shape = 'u32[144,128]{1,0:T(1,128)}', space=vmem, size = 0x12000, scoped, tag = 'internal scratch']
  %s0 = inlined_call_operand.hbm [shape: f32[2,8,16], index: 0, kind: input, shape index: {}]
  %s1 = inlined_call_operand.hbm [shape: f32[2,8,16], index: 1, kind: input, shape index: {}]
  %s2 = inlined_call_operand.hbm [shape: f32[16,64], index: 2, kind: input, shape index: {}]
  %s3 = inlined_call_operand.hbm [shape: f32[16,64], index: 3, kind: input, shape index: {}]
  %s4 = inlined_call_operand.hbm [shape: f32[8,8], index: 4, kind: input, shape index: {}]
  %s5 = inlined_call_operand.hbm [shape: f32[2,8,16], index: 5, kind: output, shape index: {}]
  %s6 = sld [smem:[#allocation0]]
  $region50: #{tpu_custom_call.1} parent=0
    _
  %s8 = ssub.s32 1, %s6
  %s9 = scalar_select 0, %s8, %s6
  $region1: #{tpu_custom_call.1} parent=0
    #allocation2 [shape = 'u8[8192]{0}', space=vmem, size = 0x2000, scoped, tag = 'input window, operand 0, single buffered']
    #allocation3 [shape = 's32[1]{0}', space=sflag, size = 0x4, scoped, tag = 'scoped memory for tpu_custom_call.1']
    #allocation4 [shape = 's32[1]{0}', space=sflag, size = 0x4, scoped, tag = 'scoped memory for tpu_custom_call.1']
    #allocation5 [shape = 'u8[8192]{0}', space=vmem, size = 0x2000, scoped, tag = 'input window, operand 1, single buffered']
    #allocation6 [shape = 's32[1]{0}', space=sflag, size = 0x4, scoped, tag = 'scoped memory for tpu_custom_call.1']
    #allocation7 [shape = 'u8[8192]{0}', space=vmem, size = 0x2000, scoped, tag = 'input window, operand 2, single buffered']
    #allocation8 [shape = 'u8[8192]{0}', space=vmem, size = 0x2000, scoped, tag = 'input window, operand 3, single buffered']
    #allocation9 [shape = 's32[1]{0}', space=sflag, size = 0x4, scoped, tag = 'scoped memory for tpu_custom_call.1']
    #allocation10 [shape = 'u8[4096]{0}', space=vmem, size = 0x1000, scoped, tag = 'input window, operand 4, single buffered']
    #allocation11 [shape = 'u8[8192]{0}', space=vmem, size = 0x2000, scoped, tag = 'output window, operand 0, single buffered']
    %10 = vsyncpa [#allocation3], 0
    %11 = vsyncpa [#allocation6], 0
    %12 = vsyncpa [#allocation9], 0
    %13 = vsyncpa [#allocation4], 0
    // Predicated region
    $region2: #{tpu_custom_call.1} parent=1 // pred_check
      _
    $region3: #{tpu_custom_call.1} parent=1 // pred_check_branch
      %15 = sbr.rel (0) target = $region5
    $region4: #{tpu_custom_call.1} parent=1 // pred_region
      %s17 = ssub.s32 256, 256
      %18 = vsyncadd [#allocation3], %s17
      %s19 = sshll.u32 [#allocation2], 4
      %s20 = int_to_ptr.vmem [resolvable:$true] %s19
      %25 = dma.hbm_to_vmem [thread:$0]  %s0, 256, %s20, [#allocation3], 128, 128, 8
    $region5: #{tpu_custom_call.1} parent=1 // pred_fallthru
      _
    // Predicated region
    $region6: #{tpu_custom_call.1} parent=1 // pred_check
      _
    $region7: #{tpu_custom_call.1} parent=1 // pred_check_branch
      %27 = sbr.rel (0) target = $region9
    $region8: #{tpu_custom_call.1} parent=1 // pred_region
      %s29 = ssub.s32 256, 256
      %30 = vsyncadd [#allocation6], %s29
      %s31 = sshll.u32 [#allocation5], 4
      %s32 = int_to_ptr.vmem [resolvable:$true] %s31
      %37 = dma.hbm_to_vmem [thread:$0]  %s1, 256, %s32, [#allocation6], 128, 128, 8
    $region9: #{tpu_custom_call.1} parent=1 // pred_fallthru
      _
    // Predicated region
    $region10: #{tpu_custom_call.1} parent=1 // pred_check
      _
    $region11: #{tpu_custom_call.1} parent=1 // pred_check_branch
      %39 = sbr.rel (0) target = $region13
    $region12: #{tpu_custom_call.1} parent=1 // pred_region
      %s41 = ssub.s32 256, 256
      %42 = vsyncadd [#allocation6], %s41
      %s43 = sshll.u32 [#allocation7], 4
      %s44 = int_to_ptr.vmem [resolvable:$true] %s43
      %49 = dma.hbm_to_vmem [thread:$0]  %s2, 256, %s44, [#allocation6], 128, 128, 8
    $region13: #{tpu_custom_call.1} parent=1 // pred_fallthru
      _
    // Predicated region
    $region14: #{tpu_custom_call.1} parent=1 // pred_check
      _
    $region15: #{tpu_custom_call.1} parent=1 // pred_check_branch
      %51 = sbr.rel (0) target = $region17
    $region16: #{tpu_custom_call.1} parent=1 // pred_region
      %s53 = ssub.s32 256, 256
      %54 = vsyncadd [#allocation9], %s53
      %s55 = sshll.u32 [#allocation8], 4
      %s56 = int_to_ptr.vmem [resolvable:$true] %s55
      %61 = dma.hbm_to_vmem [thread:$0]  %s3, 256, %s56, [#allocation9], 128, 128, 8
    $region17: #{tpu_custom_call.1} parent=1 // pred_fallthru
      _
    // Predicated region
    $region18: #{tpu_custom_call.1} parent=1 // pred_check
      _
    $region19: #{tpu_custom_call.1} parent=1 // pred_check_branch
      %63 = sbr.rel (0) target = $region21
    $region20: #{tpu_custom_call.1} parent=1 // pred_region
      %s65 = ssub.s32 128, 128
      %66 = vsyncadd [#allocation9], %s65
      %s68 = sshll.u32 [#allocation10], 4
      %s69 = int_to_ptr.vmem [resolvable:$true] %s68
      %71 = dma.hbm_to_vmem [thread:$0]  %s4, 128, %s69, [#allocation9]
    $region21: #{tpu_custom_call.1} parent=1 // pred_fallthru
      _
    // Predicated region
    $region22: #{tpu_custom_call.1} parent=1 // pred_check
      _
    $region23: #{tpu_custom_call.1} parent=1 // pred_check_branch
      %73 = sbr.rel (0) target = $region25
    $region24: #{tpu_custom_call.1} parent=1 // pred_region
      %74 = dma.done [#allocation3], 256
    $region25: #{tpu_custom_call.1} parent=1 // pred_fallthru
      _
    // Predicated region
    $region26: #{tpu_custom_call.1} parent=1 // pred_check
      _
    $region27: #{tpu_custom_call.1} parent=1 // pred_check_branch
      %76 = sbr.rel (0) target = $region29
    $region28: #{tpu_custom_call.1} parent=1 // pred_region
      %77 = dma.done [#allocation6], 256
    $region29: #{tpu_custom_call.1} parent=1 // pred_fallthru
      _
    // Predicated region
    $region30: #{tpu_custom_call.1} parent=1 // pred_check
      _
    $region31: #{tpu_custom_call.1} parent=1 // pred_check_branch
      %79 = sbr.rel (0) target = $region33
    $region32: #{tpu_custom_call.1} parent=1 // pred_region
      %80 = dma.done [#allocation6], 256
    $region33: #{tpu_custom_call.1} parent=1 // pred_fallthru
      _
    // Predicated region
    $region34: #{tpu_custom_call.1} parent=1 // pred_check
      _
    $region35: #{tpu_custom_call.1} parent=1 // pred_check_branch
      %82 = sbr.rel (0) target = $region37
    $region36: #{tpu_custom_call.1} parent=1 // pred_region
      %83 = dma.done [#allocation9], 256
    $region37: #{tpu_custom_call.1} parent=1 // pred_fallthru
      _
    // Predicated region
    $region38: #{tpu_custom_call.1} parent=1 // pred_check
      _
    $region39: #{tpu_custom_call.1} parent=1 // pred_check_branch
      %85 = sbr.rel (0) target = $region41
    $region40: #{tpu_custom_call.1} parent=1 // pred_region
      %86 = dma.done [#allocation9], 128
    $region41: #{tpu_custom_call.1} parent=1 // pred_fallthru
      _
    %v87 = vld [vmem:[#allocation2] sm:$0xff]
    %v88 = vld [vmem:[#allocation2 + $0x8] sm:$0xff]
    %v89 = vld [vmem:[#allocation5] sm:$0xff]
    %v90 = vld [vmem:[#allocation5 + $0x8] sm:$0xff]
    %v91 = vld [vmem:[#allocation7] sm:$0xff]
    %v92 = vld [vmem:[#allocation7 + $0x8] sm:$0xff]
    %v93 = vld [vmem:[#allocation8] sm:$0xff]
    %v94 = vld [vmem:[#allocation8 + $0x8] sm:$0xff]
    %vm95 = vcmask 130048
    %v97 = vsel %vm95, %v89, 0
    %v100 = vsel %vm95, %v90, 0
    %102 = vmatprep.subr.mxu0 0.0
    %103 = vmatpush1.msra.mxu0 0.0
    %104 = vmatprep.subr.mxu0 0.0
    %105 = vmatpush1.msra.mxu0 0.0
    %106 = vmatprep.subr.mxu0 0.0
    %107 = vmatpush1.msra.mxu0 0.0
    %108 = vmatprep.subr.mxu0 0.0
    %109 = vmatpush1.msra.mxu0 0.0
    %110 = vmatprep.subr.mxu0 0.0
    %111 = vmatpush1.msra.mxu0 0.0
    %112 = vmatprep.subr.mxu0 0.0
    %113 = vmatpush1.msra.mxu0 0.0
    %114 = vmatprep.subr.mxu0 0.0
    %115 = vmatpush1.msra.mxu0 0.0
    %116 = vmatprep.subr.mxu0 0.0
    %117 = vmatpush1.msra.mxu0 0.0
    %118 = vmatprep.subr.mxu0 0.0
    %119 = vmatpush1.msra.mxu0 0.0
    %120 = vmatprep.subr.mxu0 0.0
    %121 = vmatpush1.msra.mxu0 0.0
    %122 = vmatprep.subr.mxu0 0.0
    %123 = vmatpush1.msra.mxu0 0.0
    %124 = vmatprep.subr.mxu0 0.0
    %125 = vmatpush1.msra.mxu0 0.0
    %126 = vmatprep.subr.mxu0 0.0
    %127 = vmatpush1.msra.mxu0 0.0
    %128 = vmatprep.subr.mxu0 0.0
    %129 = vmatpush1.msra.mxu0 0.0
    %130 = vmatprep.subr.mxu0 0.0
    %131 = vmatpush1.msra.mxu0 %v94
    %132 = vmatprep.subr.mxu0 0.0
    %133 = vmatpush1.msra.mxu0 %v93
    %134 = vmatprep.subr.mxu0 0.0
    %135 = vmatpush2.msra.mxu0 0.0
    %136 = vmatprep.subr.mxu0 0.0
    %137 = vmatpush2.msra.mxu0 0.0
    %138 = vmatprep.subr.mxu0 0.0
    %139 = vmatpush2.msra.mxu0 0.0
    %140 = vmatprep.subr.mxu0 0.0
    %141 = vmatpush2.msra.mxu0 0.0
    %142 = vmatprep.subr.mxu0 0.0
    %143 = vmatpush2.msra.mxu0 0.0
    %144 = vmatprep.subr.mxu0 0.0
    %145 = vmatpush2.msra.mxu0 0.0
    %146 = vmatprep.subr.mxu0 0.0
    %147 = vmatpush2.msra.mxu0 0.0
    %148 = vmatprep.subr.mxu0 0.0
    %149 = vmatpush2.msra.mxu0 0.0
    %150 = vmatprep.subr.mxu0 0.0
    %151 = vmatpush2.msra.mxu0 0.0
    %152 = vmatprep.subr.mxu0 0.0
    %153 = vmatpush2.msra.mxu0 0.0
    %154 = vmatprep.subr.mxu0 0.0
    %155 = vmatpush2.msra.mxu0 0.0
    %156 = vmatprep.subr.mxu0 0.0
    %157 = vmatpush2.msra.mxu0 0.0
    %158 = vmatprep.subr.mxu0 0.0
    %159 = vmatpush2.msra.mxu0 0.0
    %160 = vmatprep.subr.mxu0 0.0
    %161 = vmatpush2.msra.mxu0 0.0
    %162 = vmatprep.subr.mxu0 0.0
    %163 = vmatpush2.msra.mxu0 0.0
    %164 = vmatprep.subr.mxu0 0.0
    %165 = vmatpush2.msra.mxu0 0.0
    %166 = vmatprep.mubr.f32.mxu0 0.0
    %167 = vmatmul.mubr.f32.gmra.mxu0 %v97
    %v168 = vpop.f32.mrf.mxu0
    %v169 = vadd.f32 0.0, %v168
    %v170 = vpop.f32.mrf.mxu0
    %171 = vmatprep.mubr.f32.mxu0 0.0
    %172 = vmatmul.mubr.f32.gmra.mxu0 %v100
    %v173 = vpop.f32.mrf.mxu0
    %v174 = vadd.f32 0.0, %v173
    %v175 = vpop.f32.mrf.mxu0
    %176 = vdwg.mxu0
    %v178 = vsel %vm95, %v87, 0
    %v181 = vsel %vm95, %v88, 0
    %183 = vmatprep.subr.mxu0 0.0
    %184 = vmatpush1.msra.mxu0 0.0
    %185 = vmatprep.subr.mxu0 0.0
    %186 = vmatpush1.msra.mxu0 0.0
    %187 = vmatprep.subr.mxu0 0.0
    %188 = vmatpush1.msra.mxu0 0.0
    %189 = vmatprep.subr.mxu0 0.0
    %190 = vmatpush1.msra.mxu0 0.0
    %191 = vmatprep.subr.mxu0 0.0
    %192 = vmatpush1.msra.mxu0 0.0
    %193 = vmatprep.subr.mxu0 0.0
    %194 = vmatpush1.msra.mxu0 0.0
    %195 = vmatprep.subr.mxu0 0.0
    %196 = vmatpush1.msra.mxu0 0.0
    %197 = vmatprep.subr.mxu0 0.0
    %198 = vmatpush1.msra.mxu0 0.0
    %199 = vmatprep.subr.mxu0 0.0
    %200 = vmatpush1.msra.mxu0 0.0
    %201 = vmatprep.subr.mxu0 0.0
    %202 = vmatpush1.msra.mxu0 0.0
    %203 = vmatprep.subr.mxu0 0.0
    %204 = vmatpush1.msra.mxu0 0.0
    %205 = vmatprep.subr.mxu0 0.0
    %206 = vmatpush1.msra.mxu0 0.0
    %207 = vmatprep.subr.mxu0 0.0
    %208 = vmatpush1.msra.mxu0 0.0
    %209 = vmatprep.subr.mxu0 0.0
    %210 = vmatpush1.msra.mxu0 0.0
    %211 = vmatprep.subr.mxu0 0.0
    %212 = vmatpush1.msra.mxu0 %v92
    %213 = vmatprep.subr.mxu0 0.0
    %214 = vmatpush1.msra.mxu0 %v91
    %215 = vmatprep.subr.mxu0 0.0
    %216 = vmatpush2.msra.mxu0 0.0
    %217 = vmatprep.subr.mxu0 0.0
    %218 = vmatpush2.msra.mxu0 0.0
    %219 = vmatprep.subr.mxu0 0.0
    %220 = vmatpush2.msra.mxu0 0.0
    %221 = vmatprep.subr.mxu0 0.0
    %222 = vmatpush2.msra.mxu0 0.0
    %223 = vmatprep.subr.mxu0 0.0
    %224 = vmatpush2.msra.mxu0 0.0
    %225 = vmatprep.subr.mxu0 0.0
    %226 = vmatpush2.msra.mxu0 0.0
    %227 = vmatprep.subr.mxu0 0.0
    %228 = vmatpush2.msra.mxu0 0.0
    %229 = vmatprep.subr.mxu0 0.0
    %230 = vmatpush2.msra.mxu0 0.0
    %231 = vmatprep.subr.mxu0 0.0
    %232 = vmatpush2.msra.mxu0 0.0
    %233 = vmatprep.subr.mxu0 0.0
    %234 = vmatpush2.msra.mxu0 0.0
    %235 = vmatprep.subr.mxu0 0.0
    %236 = vmatpush2.msra.mxu0 0.0
    %237 = vmatprep.subr.mxu0 0.0
    %238 = vmatpush2.msra.mxu0 0.0
    %239 = vmatprep.subr.mxu0 0.0
    %240 = vmatpush2.msra.mxu0 0.0
    %241 = vmatprep.subr.mxu0 0.0
    %242 = vmatpush2.msra.mxu0 0.0
    %243 = vmatprep.subr.mxu0 0.0
    %244 = vmatpush2.msra.mxu0 0.0
    %245 = vmatprep.subr.mxu0 0.0
    %246 = vmatpush2.msra.mxu0 0.0
    %247 = vmatprep.mubr.f32.mxu0 0.0
    %248 = vmatmul.mubr.f32.gmra.mxu0 %v178
    %v249 = vpop.f32.mrf.mxu0
    %v250 = vadd.f32 %v169, %v249
    %v251 = vpop.f32.mrf.mxu0
    %252 = vmatprep.mubr.f32.mxu0 0.0
    %253 = vmatmul.mubr.f32.gmra.mxu0 %v181
    %v254 = vpop.f32.mrf.mxu0
    %v255 = vadd.f32 %v174, %v254
    %v256 = vpop.f32.mrf.mxu0
    %257 = vdwg.mxu0
    %259 = vrot.lane.b32.xlu0 %v250, 96
    %v260 = vpop.permute.xlu0 %259
    %vm261 = vcmask 261120
    %v262 = vsel %vm261, %v250, 0
    %v264 = vsel %vm261, %v260, 0
    %266 = vmatprep.subr.mxu0 0.0
    %267 = vmatpush1.xpose.msra.mxu0 0.0
    %268 = vmatprep.subr.mxu0 0.0
    %269 = vmatpush1.xpose.msra.mxu0 0.0
    %270 = vmatprep.subr.mxu0 0.0
    %271 = vmatpush1.xpose.msra.mxu0 0.0
    %272 = vmatprep.subr.mxu0 0.0
    %273 = vmatpush1.xpose.msra.mxu0 0.0
    %274 = vmatprep.subr.mxu0 0.0
    %275 = vmatpush1.xpose.msra.mxu0 0.0
    %276 = vmatprep.subr.mxu0 0.0
    %277 = vmatpush1.xpose.msra.mxu0 0.0
    %278 = vmatprep.subr.mxu0 0.0
    %279 = vmatpush1.xpose.msra.mxu0 0.0
    %280 = vmatprep.subr.mxu0 0.0
    %281 = vmatpush1.xpose.msra.mxu0 0.0
    %282 = vmatprep.subr.mxu0 0.0
    %283 = vmatpush1.xpose.msra.mxu0 0.0
    %284 = vmatprep.subr.mxu0 0.0
    %285 = vmatpush1.xpose.msra.mxu0 0.0
    %286 = vmatprep.subr.mxu0 0.0
    %287 = vmatpush1.xpose.msra.mxu0 0.0
    %288 = vmatprep.subr.mxu0 0.0
    %289 = vmatpush1.xpose.msra.mxu0 0.0
    %290 = vmatprep.subr.mxu0 0.0
    %291 = vmatpush1.xpose.msra.mxu0 0.0
    %292 = vmatprep.subr.mxu0 0.0
    %293 = vmatpush1.xpose.msra.mxu0 0.0
    %294 = vmatprep.subr.mxu0 0.0
    %295 = vmatpush1.xpose.msra.mxu0 0.0
    %296 = vmatprep.subr.mxu0 0.0
    %297 = vmatpush1.xpose.msra.mxu0 %v264
    %298 = vmatprep.subr.mxu0 0.0
    %299 = vmatpush2.xpose.msra.mxu0 0.0
    %300 = vmatprep.subr.mxu0 0.0
    %301 = vmatpush2.xpose.msra.mxu0 0.0
    %302 = vmatprep.subr.mxu0 0.0
    %303 = vmatpush2.xpose.msra.mxu0 0.0
    %304 = vmatprep.subr.mxu0 0.0
    %305 = vmatpush2.xpose.msra.mxu0 0.0
    %306 = vmatprep.subr.mxu0 0.0
    %307 = vmatpush2.xpose.msra.mxu0 0.0
    %308 = vmatprep.subr.mxu0 0.0
    %309 = vmatpush2.xpose.msra.mxu0 0.0
    %310 = vmatprep.subr.mxu0 0.0
    %311 = vmatpush2.xpose.msra.mxu0 0.0
    %312 = vmatprep.subr.mxu0 0.0
    %313 = vmatpush2.xpose.msra.mxu0 0.0
    %314 = vmatprep.subr.mxu0 0.0
    %315 = vmatpush2.xpose.msra.mxu0 0.0
    %316 = vmatprep.subr.mxu0 0.0
    %317 = vmatpush2.xpose.msra.mxu0 0.0
    %318 = vmatprep.subr.mxu0 0.0
    %319 = vmatpush2.xpose.msra.mxu0 0.0
    %320 = vmatprep.subr.mxu0 0.0
    %321 = vmatpush2.xpose.msra.mxu0 0.0
    %322 = vmatprep.subr.mxu0 0.0
    %323 = vmatpush2.xpose.msra.mxu0 0.0
    %324 = vmatprep.subr.mxu0 0.0
    %325 = vmatpush2.xpose.msra.mxu0 0.0
    %326 = vmatprep.subr.mxu0 0.0
    %327 = vmatpush2.xpose.msra.mxu0 0.0
    %328 = vmatprep.subr.mxu0 0.0
    %329 = vmatpush2.xpose.msra.mxu0 0.0
    %330 = vmatprep.mubr.f32.mxu0 0.0
    %331 = vmatmul.mubr.f32.gmra.mxu0 %v262
    %v332 = vpop.f32.mrf.mxu0
    %v333 = vadd.f32 0.0, %v332
    %v334 = vpop.f32.mrf.mxu0
    %335 = vdwg.mxu0
    %337 = vrot.lane.b32.xlu0 %v255, 96
    %v338 = vpop.permute.xlu0 %337
    %v339 = vsel %vm261, %v255, 0
    %v341 = vsel %vm261, %v338, 0
    %343 = vmatprep.subr.mxu0 0.0
    %344 = vmatpush1.xpose.msra.mxu0 0.0
    %345 = vmatprep.subr.mxu0 0.0
    %346 = vmatpush1.xpose.msra.mxu0 0.0
    %347 = vmatprep.subr.mxu0 0.0
    %348 = vmatpush1.xpose.msra.mxu0 0.0
    %349 = vmatprep.subr.mxu0 0.0
    %350 = vmatpush1.xpose.msra.mxu0 0.0
    %351 = vmatprep.subr.mxu0 0.0
    %352 = vmatpush1.xpose.msra.mxu0 0.0
    %353 = vmatprep.subr.mxu0 0.0
    %354 = vmatpush1.xpose.msra.mxu0 0.0
    %355 = vmatprep.subr.mxu0 0.0
    %356 = vmatpush1.xpose.msra.mxu0 0.0
    %357 = vmatprep.subr.mxu0 0.0
    %358 = vmatpush1.xpose.msra.mxu0 0.0
    %359 = vmatprep.subr.mxu0 0.0
    %360 = vmatpush1.xpose.msra.mxu0 0.0
    %361 = vmatprep.subr.mxu0 0.0
    %362 = vmatpush1.xpose.msra.mxu0 0.0
    %363 = vmatprep.subr.mxu0 0.0
    %364 = vmatpush1.xpose.msra.mxu0 0.0
    %365 = vmatprep.subr.mxu0 0.0
    %366 = vmatpush1.xpose.msra.mxu0 0.0
    %367 = vmatprep.subr.mxu0 0.0
    %368 = vmatpush1.xpose.msra.mxu0 0.0
    %369 = vmatprep.subr.mxu0 0.0
    %370 = vmatpush1.xpose.msra.mxu0 0.0
    %371 = vmatprep.subr.mxu0 0.0
    %372 = vmatpush1.xpose.msra.mxu0 0.0
    %373 = vmatprep.subr.mxu0 0.0
    %374 = vmatpush1.xpose.msra.mxu0 %v341
    %375 = vmatprep.subr.mxu0 0.0
    %376 = vmatpush2.xpose.msra.mxu0 0.0
    %377 = vmatprep.subr.mxu0 0.0
    %378 = vmatpush2.xpose.msra.mxu0 0.0
    %379 = vmatprep.subr.mxu0 0.0
    %380 = vmatpush2.xpose.msra.mxu0 0.0
    %381 = vmatprep.subr.mxu0 0.0
    %382 = vmatpush2.xpose.msra.mxu0 0.0
    %383 = vmatprep.subr.mxu0 0.0
    %384 = vmatpush2.xpose.msra.mxu0 0.0
    %385 = vmatprep.subr.mxu0 0.0
    %386 = vmatpush2.xpose.msra.mxu0 0.0
    %387 = vmatprep.subr.mxu0 0.0
    %388 = vmatpush2.xpose.msra.mxu0 0.0
    %389 = vmatprep.subr.mxu0 0.0
    %390 = vmatpush2.xpose.msra.mxu0 0.0
    %391 = vmatprep.subr.mxu0 0.0
    %392 = vmatpush2.xpose.msra.mxu0 0.0
    %393 = vmatprep.subr.mxu0 0.0
    %394 = vmatpush2.xpose.msra.mxu0 0.0
    %395 = vmatprep.subr.mxu0 0.0
    %396 = vmatpush2.xpose.msra.mxu0 0.0
    %397 = vmatprep.subr.mxu0 0.0
    %398 = vmatpush2.xpose.msra.mxu0 0.0
    %399 = vmatprep.subr.mxu0 0.0
    %400 = vmatpush2.xpose.msra.mxu0 0.0
    %401 = vmatprep.subr.mxu0 0.0
    %402 = vmatpush2.xpose.msra.mxu0 0.0
    %403 = vmatprep.subr.mxu0 0.0
    %404 = vmatpush2.xpose.msra.mxu0 0.0
    %405 = vmatprep.subr.mxu0 0.0
    %406 = vmatpush2.xpose.msra.mxu0 0.0
    %407 = vmatprep.mubr.f32.mxu0 0.0
    %408 = vmatmul.mubr.f32.gmra.mxu0 %v339
    %v409 = vpop.f32.mrf.mxu0
    %v410 = vadd.f32 0.0, %v409
    %v411 = vpop.f32.mrf.mxu0
    %412 = vdwg.mxu0
    %v413 = vmin.f32 %v333, 10.0
    %v414 = vmin.f32 %v410, 10.0
    %v415 = vld [vmem:[#allocation10] sm:$0xff]
    %v416 = vadd.f32 %v413, %v415
    %v417 = vadd.f32 %v414, %v415
    %vm418 = vcmask 64512
    %v419 = vsel %vm418, %v416, -inf
    %420 = vmax.xlane.f32.xlu0 %v419
    %v421 = vpop.xlane.xlu0 %420
    %v422 = vsel %vm418, %v417, -inf
    %423 = vmax.xlane.f32.xlu0 %v422
    %v424 = vpop.xlane.xlu0 %423
    %v425 = vsub.f32 %v416, %v421
    %v426 = vsub.f32 %v417, %v424
    %v427 = vmul.f32 %v425, 1.442695
    %v428 = vpow.pop %v427
    %v429 = vmul.f32 %v426, 1.442695
    %v430 = vpow.pop %v429
    %v431 = vsel %vm418, %v428, 0.0
    %432 = vadd.xlane.f32.xlu0 %v431
    %v433 = vpop.xlane.xlu0 %432
    %v434 = vsel %vm418, %v430, 0.0
    %435 = vadd.xlane.f32.xlu0 %v434
    %v436 = vpop.xlane.xlu0 %435
    %v437 = vrcp.pop %v433
    %v438 = vrcp.pop %v436
    %v439 = vmul.f32 %v428, %v437
    %v440 = vmul.f32 %v430, %v438
    %v442 = vsel %vm418, %v439, 0
    %444 = vmatprep.subr.mxu0 0.0
    %445 = vmatpush1.msra.mxu0 0.0
    %446 = vmatprep.subr.mxu0 0.0
    %447 = vmatpush1.msra.mxu0 0.0
    %448 = vmatprep.subr.mxu0 0.0
    %449 = vmatpush1.msra.mxu0 0.0
    %450 = vmatprep.subr.mxu0 0.0
    %451 = vmatpush1.msra.mxu0 0.0
    %452 = vmatprep.subr.mxu0 0.0
    %453 = vmatpush1.msra.mxu0 0.0
    %454 = vmatprep.subr.mxu0 0.0
    %455 = vmatpush1.msra.mxu0 0.0
    %456 = vmatprep.subr.mxu0 0.0
    %457 = vmatpush1.msra.mxu0 0.0
    %458 = vmatprep.subr.mxu0 0.0
    %459 = vmatpush1.msra.mxu0 0.0
    %460 = vmatprep.subr.mxu0 0.0
    %461 = vmatpush1.msra.mxu0 0.0
    %462 = vmatprep.subr.mxu0 0.0
    %463 = vmatpush1.msra.mxu0 0.0
    %464 = vmatprep.subr.mxu0 0.0
    %465 = vmatpush1.msra.mxu0 0.0
    %466 = vmatprep.subr.mxu0 0.0
    %467 = vmatpush1.msra.mxu0 0.0
    %468 = vmatprep.subr.mxu0 0.0
    %469 = vmatpush1.msra.mxu0 0.0
    %470 = vmatprep.subr.mxu0 0.0
    %471 = vmatpush1.msra.mxu0 0.0
    %472 = vmatprep.subr.mxu0 0.0
    %473 = vmatpush1.msra.mxu0 0.0
    %474 = vmatprep.subr.mxu0 0.0
    %475 = vmatpush1.msra.mxu0 %v87
    %476 = vmatprep.subr.mxu0 0.0
    %477 = vmatpush2.msra.mxu0 0.0
    %478 = vmatprep.subr.mxu0 0.0
    %479 = vmatpush2.msra.mxu0 0.0
    %480 = vmatprep.subr.mxu0 0.0
    %481 = vmatpush2.msra.mxu0 0.0
    %482 = vmatprep.subr.mxu0 0.0
    %483 = vmatpush2.msra.mxu0 0.0
    %484 = vmatprep.subr.mxu0 0.0
    %485 = vmatpush2.msra.mxu0 0.0
    %486 = vmatprep.subr.mxu0 0.0
    %487 = vmatpush2.msra.mxu0 0.0
    %488 = vmatprep.subr.mxu0 0.0
    %489 = vmatpush2.msra.mxu0 0.0
    %490 = vmatprep.subr.mxu0 0.0
    %491 = vmatpush2.msra.mxu0 0.0
    %492 = vmatprep.subr.mxu0 0.0
    %493 = vmatpush2.msra.mxu0 0.0
    %494 = vmatprep.subr.mxu0 0.0
    %495 = vmatpush2.msra.mxu0 0.0
    %496 = vmatprep.subr.mxu0 0.0
    %497 = vmatpush2.msra.mxu0 0.0
    %498 = vmatprep.subr.mxu0 0.0
    %499 = vmatpush2.msra.mxu0 0.0
    %500 = vmatprep.subr.mxu0 0.0
    %501 = vmatpush2.msra.mxu0 0.0
    %502 = vmatprep.subr.mxu0 0.0
    %503 = vmatpush2.msra.mxu0 0.0
    %504 = vmatprep.subr.mxu0 0.0
    %505 = vmatpush2.msra.mxu0 0.0
    %506 = vmatprep.subr.mxu0 0.0
    %507 = vmatpush2.msra.mxu0 0.0
    %508 = vmatprep.mubr.f32.mxu0 0.0
    %509 = vmatmul.mubr.f32.gmra.mxu0 %v442
    %v510 = vpop.f32.mrf.mxu0
    %v511 = vadd.f32 0.0, %v510
    %v512 = vpop.f32.mrf.mxu0
    %513 = vdwg.mxu0
    %v515 = vsel %vm418, %v440, 0
    %517 = vmatprep.subr.mxu0 0.0
    %518 = vmatpush1.msra.mxu0 0.0
    %519 = vmatprep.subr.mxu0 0.0
    %520 = vmatpush1.msra.mxu0 0.0
    %521 = vmatprep.subr.mxu0 0.0
    %522 = vmatpush1.msra.mxu0 0.0
    %523 = vmatprep.subr.mxu0 0.0
    %524 = vmatpush1.msra.mxu0 0.0
    %525 = vmatprep.subr.mxu0 0.0
    %526 = vmatpush1.msra.mxu0 0.0
    %527 = vmatprep.subr.mxu0 0.0
    %528 = vmatpush1.msra.mxu0 0.0
    %529 = vmatprep.subr.mxu0 0.0
    %530 = vmatpush1.msra.mxu0 0.0
    %531 = vmatprep.subr.mxu0 0.0
    %532 = vmatpush1.msra.mxu0 0.0
    %533 = vmatprep.subr.mxu0 0.0
    %534 = vmatpush1.msra.mxu0 0.0
    %535 = vmatprep.subr.mxu0 0.0
    %536 = vmatpush1.msra.mxu0 0.0
    %537 = vmatprep.subr.mxu0 0.0
    %538 = vmatpush1.msra.mxu0 0.0
    %539 = vmatprep.subr.mxu0 0.0
    %540 = vmatpush1.msra.mxu0 0.0
    %541 = vmatprep.subr.mxu0 0.0
    %542 = vmatpush1.msra.mxu0 0.0
    %543 = vmatprep.subr.mxu0 0.0
    %544 = vmatpush1.msra.mxu0 0.0
    %545 = vmatprep.subr.mxu0 0.0
    %546 = vmatpush1.msra.mxu0 0.0
    %547 = vmatprep.subr.mxu0 0.0
    %548 = vmatpush1.msra.mxu0 %v88
    %549 = vmatprep.subr.mxu0 0.0
    %550 = vmatpush2.msra.mxu0 0.0
    %551 = vmatprep.subr.mxu0 0.0
    %552 = vmatpush2.msra.mxu0 0.0
    %553 = vmatprep.subr.mxu0 0.0
    %554 = vmatpush2.msra.mxu0 0.0
    %555 = vmatprep.subr.mxu0 0.0
    %556 = vmatpush2.msra.mxu0 0.0
    %557 = vmatprep.subr.mxu0 0.0
    %558 = vmatpush2.msra.mxu0 0.0
    %559 = vmatprep.subr.mxu0 0.0
    %560 = vmatpush2.msra.mxu0 0.0
    %561 = vmatprep.subr.mxu0 0.0
    %562 = vmatpush2.msra.mxu0 0.0
    %563 = vmatprep.subr.mxu0 0.0
    %564 = vmatpush2.msra.mxu0 0.0
    %565 = vmatprep.subr.mxu0 0.0
    %566 = vmatpush2.msra.mxu0 0.0
    %567 = vmatprep.subr.mxu0 0.0
    %568 = vmatpush2.msra.mxu0 0.0
    %569 = vmatprep.subr.mxu0 0.0
    %570 = vmatpush2.msra.mxu0 0.0
    %571 = vmatprep.subr.mxu0 0.0
    %572 = vmatpush2.msra.mxu0 0.0
    %573 = vmatprep.subr.mxu0 0.0
    %574 = vmatpush2.msra.mxu0 0.0
    %575 = vmatprep.subr.mxu0 0.0
    %576 = vmatpush2.msra.mxu0 0.0
    %577 = vmatprep.subr.mxu0 0.0
    %578 = vmatpush2.msra.mxu0 0.0
    %579 = vmatprep.subr.mxu0 0.0
    %580 = vmatpush2.msra.mxu0 0.0
    %581 = vmatprep.mubr.f32.mxu0 0.0
    %582 = vmatmul.mubr.f32.gmra.mxu0 %v515
    %v583 = vpop.f32.mrf.mxu0
    %v584 = vadd.f32 0.0, %v583
    %v585 = vpop.f32.mrf.mxu0
    %586 = vdwg.mxu0
    %587 = vst.msk [vmem:[#allocation11] sm:$0xff] %vm95, %v511
    %588 = vst.msk [vmem:[#allocation11 + $0x8] sm:$0xff] %vm95, %v584
    // Predicated region
    $region42: #{tpu_custom_call.1} parent=1 // pred_check
      _
    $region43: #{tpu_custom_call.1} parent=1 // pred_check_branch
      %590 = sbr.rel (0) target = $region45
    $region44: #{tpu_custom_call.1} parent=1 // pred_region
      %s592 = ssub.s32 256, 256
      %593 = vsyncadd [#allocation4], %s592
      %s594 = sshll.u32 [#allocation11], 4
      %s595 = int_to_ptr.vmem [resolvable:$true] %s594
      %600 = dma.vmem_to_hbm [thread:$0]  %s595, 256, %s5, [#allocation4], 128, 128, 8
    $region45: #{tpu_custom_call.1} parent=1 // pred_fallthru
      _
    // Predicated region
    $region46: #{tpu_custom_call.1} parent=1 // pred_check
      _
    $region47: #{tpu_custom_call.1} parent=1 // pred_check_branch
      %602 = sbr.rel (0) target = $region49
    $region48: #{tpu_custom_call.1} parent=1 // pred_region
      %603 = dma.done [#allocation4], 256
    $region49: #{tpu_custom_call.1} parent=1 // pred_fallthru
      _
    %604 = vsyncpa [#allocation3], 1
    %605 = vsyncpa [#allocation6], 1
    %606 = vsyncpa [#allocation9], 1
    %607 = vsyncpa [#allocation4], 1

</llo_original>
